<compile_context>
chip_gen: v7x
topology: tpu7x:2x2x1
jax: 0.10.0
libtpu: 0.0.40
codegen_flags: <defaults>
</compile_context>

<pallas_src>
import functools

import jax
import jax.numpy as jnp
from jax import lax
from jax.experimental import pallas as pl


def _round_up(x, m):
    return -(-x // m) * m


def gru_tagger_kernel(ids_ref, emb_ref, wih_ref, whh_ref, bih_ref, bhh_ref,
                      wout_ref, bout_ref, out_ref, *, hidden_pad):
    """Full forward pass on one TensorCore (grid=()).

    ids_ref  : (L, 1)        int32   token ids
    emb_ref  : (V, E)        f32     embedding table
    wih_ref  : (E, 3*HP)     f32     transposed weight_ih, per-gate lane-padded
    whh_ref  : (HP, 3*HP)    f32     transposed weight_hh, padded rows + gates
    bih_ref  : (1, 3*HP)     f32
    bhh_ref  : (1, 3*HP)     f32
    wout_ref : (HP, T)       f32     transposed hidden2tag.weight, padded rows
    bout_ref : (1, T)        f32
    out_ref  : (L, T)        f32     log-probabilities
    """
    HP = hidden_pad
    L = ids_ref.shape[0]
    V = emb_ref.shape[0]

    # ---- fused embedding gather via one-hot matmul (tiny vocab) -------------
    # TODO(synk): for a large vocab, replace with PrefetchScalarGridSpec +
    # pl.Element row gather instead of pulling the whole table into VMEM.
    ids = ids_ref[...]                                               # (L, 1)
    vocab_iota = lax.broadcasted_iota(jnp.int32, (L, V), 1)          # (L, V)
    onehot = (vocab_iota == ids).astype(jnp.float32)                 # (L, V)
    embeds = jnp.dot(onehot, emb_ref[...],
                     preferred_element_type=jnp.float32)             # (L, E)

    # ---- hoisted input projection: one MXU matmul for all timesteps ---------
    gi_all = jnp.dot(embeds, wih_ref[...],
                     preferred_element_type=jnp.float32) + bih_ref[...]  # (L, 3*HP)

    whh = whh_ref[...]                                               # (HP, 3*HP)
    bhh = bhh_ref[...]                                               # (1, 3*HP)

    # ---- GRU recurrence (PyTorch gate order r, z, n), fully unrolled --------
    # Padded lanes stay exactly zero: r_pad = z_pad = sigmoid(0) = 0.5,
    # n_pad = tanh(0) = 0  =>  h_pad = 0.5*0 + 0.5*0 = 0 every step.
    h = jnp.zeros((1, HP), jnp.float32)
    hs_rows = []
    for t in range(L):                                   # static unroll
        gi = gi_all[t:t + 1, :]                          # (1, 3*HP) static slice
        gh = jnp.dot(h, whh, preferred_element_type=jnp.float32) + bhh
        r = jax.nn.sigmoid(gi[:, 0 * HP:1 * HP] + gh[:, 0 * HP:1 * HP])
        z = jax.nn.sigmoid(gi[:, 1 * HP:2 * HP] + gh[:, 1 * HP:2 * HP])
        n = jnp.tanh(gi[:, 2 * HP:3 * HP] + r * gh[:, 2 * HP:3 * HP])
        h = (1.0 - z) * n + z * h                        # (1, HP)
        hs_rows.append(h)
    hs = jnp.concatenate(hs_rows, axis=0)                # (L, HP), in vregs

    # ---- hidden2tag linear + log_softmax over the tag axis ------------------
    logits = jnp.dot(hs, wout_ref[...],
                     preferred_element_type=jnp.float32) + bout_ref[...]  # (L, T)
    m = jnp.max(logits, axis=-1, keepdims=True)
    shifted = logits - m
    lse = jnp.log(jnp.sum(jnp.exp(shifted), axis=-1, keepdims=True))
    out_ref[...] = shifted - lse


def _pad_gate_cols(w, H, HP):
    """(..., 3H) -> (..., 3*HP): each gate block zero-padded to HP lanes."""
    lead = w.shape[:-1]
    w3 = w.reshape(lead + (3, H))
    w3 = jnp.pad(w3, [(0, 0)] * (len(lead) + 1) + [(0, HP - H)])
    return w3.reshape(lead + (3 * HP,))


def gru_tagger_forward(sentence, params):
    """sentence: (L,) int token ids. Returns (L, tagset_size) log-probs."""
    emb_table = params["embedding"].astype(jnp.float32)    # (V, E)
    w_ih_t = params["w_ih_t"]                              # (E, 3H)
    w_hh_t = params["w_hh_t"]                              # (H, 3H)
    b_ih = params["b_ih"]                                  # (1, 3H)
    b_hh = params["b_hh"]                                  # (1, 3H)
    w_out_t = params["w_out_t"]                            # (H, T)
    b_out = params["b_out"]                                # (1, T)

    L = sentence.shape[0]
    H = w_hh_t.shape[0]
    T = w_out_t.shape[1]
    HP = _round_up(H, 128)                                 # lane-aligned gate width

    # Lane-align each gate to its own HP-wide block; pad the hidden axis too.
    # Weights are tiny (a few KiB), so the padding cost is negligible.
    w_ih_p = _pad_gate_cols(w_ih_t, H, HP)                                # (E, 3*HP)
    w_hh_p = jnp.pad(_pad_gate_cols(w_hh_t, H, HP), ((0, HP - H), (0, 0)))  # (HP, 3*HP)
    b_ih_p = _pad_gate_cols(b_ih, H, HP)                                  # (1, 3*HP)
    b_hh_p = _pad_gate_cols(b_hh, H, HP)                                  # (1, 3*HP)
    w_out_p = jnp.pad(w_out_t, ((0, HP - H), (0, 0)))                     # (HP, T)

    ids_2d = sentence.reshape(L, 1).astype(jnp.int32)

    kernel = functools.partial(gru_tagger_kernel, hidden_pad=HP)
    # grid=(): single sentence -> single TensorCore is correct.
    # TODO(synk): for batched sentences, stack them on the matmul row dim and
    # add a leading batch grid axis with dimension_semantics=("parallel",) so
    # v7x can split the batch over both TensorCores.
    return pl.pallas_call(
        kernel,
        out_shape=jax.ShapeDtypeStruct((L, T), jnp.float32),
    )(ids_2d, emb_table, w_ih_p, w_hh_p, b_ih_p, b_hh_p, w_out_p, b_out)


def init_params(key, vocab_size, embedding_dim, hidden_dim, tagset_size):
    """Deterministic synthetic parameters matching the nn.Module shapes."""
    ks = jax.random.split(key, 7)
    k = 1.0 / jnp.sqrt(hidden_dim)
    u = lambda kk, shape, scale: jax.random.uniform(
        kk, shape, jnp.float32, minval=-scale, maxval=scale)
    return {
        # nn.Embedding(vocab, E): N(0, 1)
        "embedding": jax.random.normal(ks[0], (vocab_size, embedding_dim),
                                       jnp.float32),
        # nn.GRU(E, H): weight_ih (3H, E), weight_hh (3H, H) -> stored transposed
        "w_ih_t": u(ks[1], (embedding_dim, 3 * hidden_dim), k),
        "w_hh_t": u(ks[2], (hidden_dim, 3 * hidden_dim), k),
        "b_ih": u(ks[3], (1, 3 * hidden_dim), k),
        "b_hh": u(ks[4], (1, 3 * hidden_dim), k),
        # nn.Linear(H, T): weight (T, H) -> stored transposed
        "w_out_t": u(ks[5], (hidden_dim, tagset_size), 1.0 / jnp.sqrt(hidden_dim)),
        "b_out": u(ks[6], (1, tagset_size), 1.0 / jnp.sqrt(hidden_dim)),
    }


def reference_forward(sentence, params):
    """Pure-JAX reference (same math, no Pallas) for a sanity check."""
    H = params["w_hh_t"].shape[0]
    embeds = jnp.take(params["embedding"], sentence, axis=0).astype(jnp.float32)

    def step(h, x_t):
        gi = x_t[None, :] @ params["w_ih_t"] + params["b_ih"]
        gh = h @ params["w_hh_t"] + params["b_hh"]
        r = jax.nn.sigmoid(gi[:, :H] + gh[:, :H])
        z = jax.nn.sigmoid(gi[:, H:2 * H] + gh[:, H:2 * H])
        n = jnp.tanh(gi[:, 2 * H:] + r * gh[:, 2 * H:])
        h_new = (1.0 - z) * n + z * h
        return h_new, h_new[0]

    h0 = jnp.zeros((1, H), jnp.float32)
    _, hs = lax.scan(step, h0, embeds)
    logits = hs @ params["w_out_t"] + params["b_out"]
    return jax.nn.log_softmax(logits, axis=1)


if __name__ == "__main__":
    EMBEDDING_DIM = 16
    HIDDEN_DIM = 32
    VOCAB_SIZE = 20
    TAGSET_SIZE = 8
    SEQ_LEN = 8

    key = jax.random.PRNGKey(0)
    pkey, skey = jax.random.split(key)
    params = init_params(pkey, VOCAB_SIZE, EMBEDDING_DIM, HIDDEN_DIM, TAGSET_SIZE)
    sentence = jax.random.randint(skey, (SEQ_LEN,), 0, VOCAB_SIZE, dtype=jnp.int32)

    out = gru_tagger_forward(sentence, params)
    out = jax.block_until_ready(out)

    ref = reference_forward(sentence, params)
    assert out.shape == (SEQ_LEN, TAGSET_SIZE)
    assert jnp.allclose(out, ref, atol=1e-4, rtol=1e-4), "mismatch vs reference"
    # log-softmax rows should sum to ~1 in prob space
    assert jnp.allclose(jnp.sum(jnp.exp(out), axis=1), 1.0, atol=1e-4)

    print("KERNEL_OK")
</pallas_src>

<mosaic_0001>
module attributes {stable_mosaic.version = 11 : i64} {
  func.func @gru_tagger_kernel(%arg0: memref<8x1xi32, #tpu.memory_space<vmem>>, %arg1: memref<20x16xf32, #tpu.memory_space<vmem>>, %arg2: memref<16x384xf32, #tpu.memory_space<vmem>>, %arg3: memref<128x384xf32, #tpu.memory_space<vmem>>, %arg4: memref<1x384xf32, #tpu.memory_space<vmem>>, %arg5: memref<1x384xf32, #tpu.memory_space<vmem>>, %arg6: memref<128x8xf32, #tpu.memory_space<vmem>>, %arg7: memref<1x8xf32, #tpu.memory_space<vmem>>, %arg8: memref<8x8xf32, #tpu.memory_space<vmem>>) attributes {dimension_semantics = [], scalar_prefetch = 0 : i64, scratch_operands = 0 : i64, tpu.core_type = #tpu.core_type<tc>} {
    %c0 = arith.constant 0 : index
    %c0_0 = arith.constant 0 : index
    %0 = vector.load %arg0[%c0, %c0_0] : memref<8x1xi32, #tpu.memory_space<vmem>>, vector<8x1xi32>
    %1 = tpu.iota {dimensions = array<i32: 1>} : vector<8x20xi32>
    %2 = vector.broadcast %0 : vector<8x1xi32> to vector<8x20xi32>
    %3 = arith.cmpi eq, %1, %2 : vector<8x20xi32>
    %4 = arith.extui %3 : vector<8x20xi1> to vector<8x20xi32>
    %5 = arith.sitofp %4 : vector<8x20xi32> to vector<8x20xf32>
    %c0_1 = arith.constant 0 : index
    %c0_2 = arith.constant 0 : index
    %6 = vector.load %arg1[%c0_1, %c0_2] : memref<20x16xf32, #tpu.memory_space<vmem>>, vector<20x16xf32>
    %cst = arith.constant dense<0.000000e+00> : vector<8x16xf32>
    %7 = tpu.matmul %5, %6, %cst {dimension_numbers = #tpu.dot_dimension_numbers<[1], [0], [0], [1], [0, 0, 1, 1], [], []>} : vector<8x20xf32>, vector<20x16xf32>, vector<8x16xf32> -> vector<8x16xf32>
    %c0_3 = arith.constant 0 : index
    %c0_4 = arith.constant 0 : index
    %8 = vector.load %arg2[%c0_3, %c0_4] : memref<16x384xf32, #tpu.memory_space<vmem>>, vector<16x384xf32>
    %cst_5 = arith.constant dense<0.000000e+00> : vector<8x384xf32>
    %9 = tpu.matmul %7, %8, %cst_5 {dimension_numbers = #tpu.dot_dimension_numbers<[1], [0], [0], [1], [0, 0, 1, 1], [], []>} : vector<8x16xf32>, vector<16x384xf32>, vector<8x384xf32> -> vector<8x384xf32>
    %c0_6 = arith.constant 0 : index
    %c0_7 = arith.constant 0 : index
    %10 = vector.load %arg4[%c0_6, %c0_7] : memref<1x384xf32, #tpu.memory_space<vmem>>, vector<1x384xf32>
    %11 = vector.broadcast %10 : vector<1x384xf32> to vector<8x384xf32>
    %12 = arith.addf %9, %11 : vector<8x384xf32>
    %c0_8 = arith.constant 0 : index
    %c0_9 = arith.constant 0 : index
    %13 = vector.load %arg3[%c0_8, %c0_9] : memref<128x384xf32, #tpu.memory_space<vmem>>, vector<128x384xf32>
    %c0_10 = arith.constant 0 : index
    %c0_11 = arith.constant 0 : index
    %14 = vector.load %arg5[%c0_10, %c0_11] : memref<1x384xf32, #tpu.memory_space<vmem>>, vector<1x384xf32>
    %cst_12 = arith.constant 0.000000e+00 : f32
    %15 = vector.broadcast %cst_12 : f32 to vector<1x128xf32>
    %16 = vector.extract_strided_slice %12 {offsets = [0, 0], sizes = [1, 384], strides = [1, 1]} : vector<8x384xf32> to vector<1x384xf32>
    %cst_13 = arith.constant dense<0.000000e+00> : vector<1x384xf32>
    %17 = tpu.matmul %15, %13, %cst_13 {dimension_numbers = #tpu.dot_dimension_numbers<[1], [0], [0], [1], [0, 0, 1, 1], [], []>} : vector<1x128xf32>, vector<128x384xf32>, vector<1x384xf32> -> vector<1x384xf32>
    %18 = arith.addf %17, %14 : vector<1x384xf32>
    %19 = vector.extract_strided_slice %16 {offsets = [0, 0], sizes = [1, 128], strides = [1, 1]} : vector<1x384xf32> to vector<1x128xf32>
    %20 = vector.extract_strided_slice %18 {offsets = [0, 0], sizes = [1, 128], strides = [1, 1]} : vector<1x384xf32> to vector<1x128xf32>
    %21 = arith.addf %19, %20 : vector<1x128xf32>
    %22 = arith.negf %21 : vector<1x128xf32>
    %23 = math.exp %22 : vector<1x128xf32>
    %cst_14 = arith.constant 1.000000e+00 : f32
    %24 = vector.broadcast %cst_14 : f32 to vector<1x128xf32>
    %25 = arith.addf %24, %23 : vector<1x128xf32>
    %26 = arith.divf %24, %25 : vector<1x128xf32>
    %27 = vector.extract_strided_slice %16 {offsets = [0, 128], sizes = [1, 128], strides = [1, 1]} : vector<1x384xf32> to vector<1x128xf32>
    %28 = vector.extract_strided_slice %18 {offsets = [0, 128], sizes = [1, 128], strides = [1, 1]} : vector<1x384xf32> to vector<1x128xf32>
    %29 = arith.addf %27, %28 : vector<1x128xf32>
    %30 = arith.negf %29 : vector<1x128xf32>
    %31 = math.exp %30 : vector<1x128xf32>
    %cst_15 = arith.constant 1.000000e+00 : f32
    %32 = vector.broadcast %cst_15 : f32 to vector<1x128xf32>
    %33 = arith.addf %32, %31 : vector<1x128xf32>
    %34 = arith.divf %32, %33 : vector<1x128xf32>
    %35 = vector.extract_strided_slice %16 {offsets = [0, 256], sizes = [1, 128], strides = [1, 1]} : vector<1x384xf32> to vector<1x128xf32>
    %36 = vector.extract_strided_slice %18 {offsets = [0, 256], sizes = [1, 128], strides = [1, 1]} : vector<1x384xf32> to vector<1x128xf32>
    %37 = arith.mulf %26, %36 : vector<1x128xf32>
    %38 = arith.addf %35, %37 : vector<1x128xf32>
    %39 = math.tanh %38 : vector<1x128xf32>
    %cst_16 = arith.constant 1.000000e+00 : f32
    %40 = vector.broadcast %cst_16 : f32 to vector<1x128xf32>
    %41 = arith.subf %40, %34 : vector<1x128xf32>
    %42 = arith.mulf %41, %39 : vector<1x128xf32>
    %43 = arith.mulf %34, %15 : vector<1x128xf32>
    %44 = arith.addf %42, %43 : vector<1x128xf32>
    %45 = vector.extract_strided_slice %12 {offsets = [1, 0], sizes = [1, 384], strides = [1, 1]} : vector<8x384xf32> to vector<1x384xf32>
    %cst_17 = arith.constant dense<0.000000e+00> : vector<1x384xf32>
    %46 = tpu.matmul %44, %13, %cst_17 {dimension_numbers = #tpu.dot_dimension_numbers<[1], [0], [0], [1], [0, 0, 1, 1], [], []>} : vector<1x128xf32>, vector<128x384xf32>, vector<1x384xf32> -> vector<1x384xf32>
    %47 = arith.addf %46, %14 : vector<1x384xf32>
    %48 = vector.extract_strided_slice %45 {offsets = [0, 0], sizes = [1, 128], strides = [1, 1]} : vector<1x384xf32> to vector<1x128xf32>
    %49 = vector.extract_strided_slice %47 {offsets = [0, 0], sizes = [1, 128], strides = [1, 1]} : vector<1x384xf32> to vector<1x128xf32>
    %50 = arith.addf %48, %49 : vector<1x128xf32>
    %51 = arith.negf %50 : vector<1x128xf32>
    %52 = math.exp %51 : vector<1x128xf32>
    %cst_18 = arith.constant 1.000000e+00 : f32
    %53 = vector.broadcast %cst_18 : f32 to vector<1x128xf32>
    %54 = arith.addf %53, %52 : vector<1x128xf32>
    %55 = arith.divf %53, %54 : vector<1x128xf32>
    %56 = vector.extract_strided_slice %45 {offsets = [0, 128], sizes = [1, 128], strides = [1, 1]} : vector<1x384xf32> to vector<1x128xf32>
    %57 = vector.extract_strided_slice %47 {offsets = [0, 128], sizes = [1, 128], strides = [1, 1]} : vector<1x384xf32> to vector<1x128xf32>
    %58 = arith.addf %56, %57 : vector<1x128xf32>
    %59 = arith.negf %58 : vector<1x128xf32>
    %60 = math.exp %59 : vector<1x128xf32>
    %cst_19 = arith.constant 1.000000e+00 : f32
    %61 = vector.broadcast %cst_19 : f32 to vector<1x128xf32>
    %62 = arith.addf %61, %60 : vector<1x128xf32>
    %63 = arith.divf %61, %62 : vector<1x128xf32>
    %64 = vector.extract_strided_slice %45 {offsets = [0, 256], sizes = [1, 128], strides = [1, 1]} : vector<1x384xf32> to vector<1x128xf32>
    %65 = vector.extract_strided_slice %47 {offsets = [0, 256], sizes = [1, 128], strides = [1, 1]} : vector<1x384xf32> to vector<1x128xf32>
    %66 = arith.mulf %55, %65 : vector<1x128xf32>
    %67 = arith.addf %64, %66 : vector<1x128xf32>
    %68 = math.tanh %67 : vector<1x128xf32>
    %cst_20 = arith.constant 1.000000e+00 : f32
    %69 = vector.broadcast %cst_20 : f32 to vector<1x128xf32>
    %70 = arith.subf %69, %63 : vector<1x128xf32>
    %71 = arith.mulf %70, %68 : vector<1x128xf32>
    %72 = arith.mulf %63, %44 : vector<1x128xf32>
    %73 = arith.addf %71, %72 : vector<1x128xf32>
    %74 = vector.extract_strided_slice %12 {offsets = [2, 0], sizes = [1, 384], strides = [1, 1]} : vector<8x384xf32> to vector<1x384xf32>
    %cst_21 = arith.constant dense<0.000000e+00> : vector<1x384xf32>
    %75 = tpu.matmul %73, %13, %cst_21 {dimension_numbers = #tpu.dot_dimension_numbers<[1], [0], [0], [1], [0, 0, 1, 1], [], []>} : vector<1x128xf32>, vector<128x384xf32>, vector<1x384xf32> -> vector<1x384xf32>
    %76 = arith.addf %75, %14 : vector<1x384xf32>
    %77 = vector.extract_strided_slice %74 {offsets = [0, 0], sizes = [1, 128], strides = [1, 1]} : vector<1x384xf32> to vector<1x128xf32>
    %78 = vector.extract_strided_slice %76 {offsets = [0, 0], sizes = [1, 128], strides = [1, 1]} : vector<1x384xf32> to vector<1x128xf32>
    %79 = arith.addf %77, %78 : vector<1x128xf32>
    %80 = arith.negf %79 : vector<1x128xf32>
    %81 = math.exp %80 : vector<1x128xf32>
    %cst_22 = arith.constant 1.000000e+00 : f32
    %82 = vector.broadcast %cst_22 : f32 to vector<1x128xf32>
    %83 = arith.addf %82, %81 : vector<1x128xf32>
    %84 = arith.divf %82, %83 : vector<1x128xf32>
    %85 = vector.extract_strided_slice %74 {offsets = [0, 128], sizes = [1, 128], strides = [1, 1]} : vector<1x384xf32> to vector<1x128xf32>
    %86 = vector.extract_strided_slice %76 {offsets = [0, 128], sizes = [1, 128], strides = [1, 1]} : vector<1x384xf32> to vector<1x128xf32>
    %87 = arith.addf %85, %86 : vector<1x128xf32>
    %88 = arith.negf %87 : vector<1x128xf32>
    %89 = math.exp %88 : vector<1x128xf32>
    %cst_23 = arith.constant 1.000000e+00 : f32
    %90 = vector.broadcast %cst_23 : f32 to vector<1x128xf32>
    %91 = arith.addf %90, %89 : vector<1x128xf32>
    %92 = arith.divf %90, %91 : vector<1x128xf32>
    %93 = vector.extract_strided_slice %74 {offsets = [0, 256], sizes = [1, 128], strides = [1, 1]} : vector<1x384xf32> to vector<1x128xf32>
    %94 = vector.extract_strided_slice %76 {offsets = [0, 256], sizes = [1, 128], strides = [1, 1]} : vector<1x384xf32> to vector<1x128xf32>
    %95 = arith.mulf %84, %94 : vector<1x128xf32>
    %96 = arith.addf %93, %95 : vector<1x128xf32>
    %97 = math.tanh %96 : vector<1x128xf32>
    %cst_24 = arith.constant 1.000000e+00 : f32
    %98 = vector.broadcast %cst_24 : f32 to vector<1x128xf32>
    %99 = arith.subf %98, %92 : vector<1x128xf32>
    %100 = arith.mulf %99, %97 : vector<1x128xf32>
    %101 = arith.mulf %92, %73 : vector<1x128xf32>
    %102 = arith.addf %100, %101 : vector<1x128xf32>
    %103 = vector.extract_strided_slice %12 {offsets = [3, 0], sizes = [1, 384], strides = [1, 1]} : vector<8x384xf32> to vector<1x384xf32>
    %cst_25 = arith.constant dense<0.000000e+00> : vector<1x384xf32>
    %104 = tpu.matmul %102, %13, %cst_25 {dimension_numbers = #tpu.dot_dimension_numbers<[1], [0], [0], [1], [0, 0, 1, 1], [], []>} : vector<1x128xf32>, vector<128x384xf32>, vector<1x384xf32> -> vector<1x384xf32>
    %105 = arith.addf %104, %14 : vector<1x384xf32>
    %106 = vector.extract_strided_slice %103 {offsets = [0, 0], sizes = [1, 128], strides = [1, 1]} : vector<1x384xf32> to vector<1x128xf32>
    %107 = vector.extract_strided_slice %105 {offsets = [0, 0], sizes = [1, 128], strides = [1, 1]} : vector<1x384xf32> to vector<1x128xf32>
    %108 = arith.addf %106, %107 : vector<1x128xf32>
    %109 = arith.negf %108 : vector<1x128xf32>
    %110 = math.exp %109 : vector<1x128xf32>
    %cst_26 = arith.constant 1.000000e+00 : f32
    %111 = vector.broadcast %cst_26 : f32 to vector<1x128xf32>
    %112 = arith.addf %111, %110 : vector<1x128xf32>
    %113 = arith.divf %111, %112 : vector<1x128xf32>
    %114 = vector.extract_strided_slice %103 {offsets = [0, 128], sizes = [1, 128], strides = [1, 1]} : vector<1x384xf32> to vector<1x128xf32>
    %115 = vector.extract_strided_slice %105 {offsets = [0, 128], sizes = [1, 128], strides = [1, 1]} : vector<1x384xf32> to vector<1x128xf32>
    %116 = arith.addf %114, %115 : vector<1x128xf32>
    %117 = arith.negf %116 : vector<1x128xf32>
    %118 = math.exp %117 : vector<1x128xf32>
    %cst_27 = arith.constant 1.000000e+00 : f32
    %119 = vector.broadcast %cst_27 : f32 to vector<1x128xf32>
    %120 = arith.addf %119, %118 : vector<1x128xf32>
    %121 = arith.divf %119, %120 : vector<1x128xf32>
    %122 = vector.extract_strided_slice %103 {offsets = [0, 256], sizes = [1, 128], strides = [1, 1]} : vector<1x384xf32> to vector<1x128xf32>
    %123 = vector.extract_strided_slice %105 {offsets = [0, 256], sizes = [1, 128], strides = [1, 1]} : vector<1x384xf32> to vector<1x128xf32>
    %124 = arith.mulf %113, %123 : vector<1x128xf32>
    %125 = arith.addf %122, %124 : vector<1x128xf32>
    %126 = math.tanh %125 : vector<1x128xf32>
    %cst_28 = arith.constant 1.000000e+00 : f32
    %127 = vector.broadcast %cst_28 : f32 to vector<1x128xf32>
    %128 = arith.subf %127, %121 : vector<1x128xf32>
    %129 = arith.mulf %128, %126 : vector<1x128xf32>
    %130 = arith.mulf %121, %102 : vector<1x128xf32>
    %131 = arith.addf %129, %130 : vector<1x128xf32>
    %132 = vector.extract_strided_slice %12 {offsets = [4, 0], sizes = [1, 384], strides = [1, 1]} : vector<8x384xf32> to vector<1x384xf32>
    %cst_29 = arith.constant dense<0.000000e+00> : vector<1x384xf32>
    %133 = tpu.matmul %131, %13, %cst_29 {dimension_numbers = #tpu.dot_dimension_numbers<[1], [0], [0], [1], [0, 0, 1, 1], [], []>} : vector<1x128xf32>, vector<128x384xf32>, vector<1x384xf32> -> vector<1x384xf32>
    %134 = arith.addf %133, %14 : vector<1x384xf32>
    %135 = vector.extract_strided_slice %132 {offsets = [0, 0], sizes = [1, 128], strides = [1, 1]} : vector<1x384xf32> to vector<1x128xf32>
    %136 = vector.extract_strided_slice %134 {offsets = [0, 0], sizes = [1, 128], strides = [1, 1]} : vector<1x384xf32> to vector<1x128xf32>
    %137 = arith.addf %135, %136 : vector<1x128xf32>
    %138 = arith.negf %137 : vector<1x128xf32>
    %139 = math.exp %138 : vector<1x128xf32>
    %cst_30 = arith.constant 1.000000e+00 : f32
    %140 = vector.broadcast %cst_30 : f32 to vector<1x128xf32>
    %141 = arith.addf %140, %139 : vector<1x128xf32>
    %142 = arith.divf %140, %141 : vector<1x128xf32>
    %143 = vector.extract_strided_slice %132 {offsets = [0, 128], sizes = [1, 128], strides = [1, 1]} : vector<1x384xf32> to vector<1x128xf32>
    %144 = vector.extract_strided_slice %134 {offsets = [0, 128], sizes = [1, 128], strides = [1, 1]} : vector<1x384xf32> to vector<1x128xf32>
    %145 = arith.addf %143, %144 : vector<1x128xf32>
    %146 = arith.negf %145 : vector<1x128xf32>
    %147 = math.exp %146 : vector<1x128xf32>
    %cst_31 = arith.constant 1.000000e+00 : f32
    %148 = vector.broadcast %cst_31 : f32 to vector<1x128xf32>
    %149 = arith.addf %148, %147 : vector<1x128xf32>
    %150 = arith.divf %148, %149 : vector<1x128xf32>
    %151 = vector.extract_strided_slice %132 {offsets = [0, 256], sizes = [1, 128], strides = [1, 1]} : vector<1x384xf32> to vector<1x128xf32>
    %152 = vector.extract_strided_slice %134 {offsets = [0, 256], sizes = [1, 128], strides = [1, 1]} : vector<1x384xf32> to vector<1x128xf32>
    %153 = arith.mulf %142, %152 : vector<1x128xf32>
    %154 = arith.addf %151, %153 : vector<1x128xf32>
    %155 = math.tanh %154 : vector<1x128xf32>
    %cst_32 = arith.constant 1.000000e+00 : f32
    %156 = vector.broadcast %cst_32 : f32 to vector<1x128xf32>
    %157 = arith.subf %156, %150 : vector<1x128xf32>
    %158 = arith.mulf %157, %155 : vector<1x128xf32>
    %159 = arith.mulf %150, %131 : vector<1x128xf32>
    %160 = arith.addf %158, %159 : vector<1x128xf32>
    %161 = vector.extract_strided_slice %12 {offsets = [5, 0], sizes = [1, 384], strides = [1, 1]} : vector<8x384xf32> to vector<1x384xf32>
    %cst_33 = arith.constant dense<0.000000e+00> : vector<1x384xf32>
    %162 = tpu.matmul %160, %13, %cst_33 {dimension_numbers = #tpu.dot_dimension_numbers<[1], [0], [0], [1], [0, 0, 1, 1], [], []>} : vector<1x128xf32>, vector<128x384xf32>, vector<1x384xf32> -> vector<1x384xf32>
    %163 = arith.addf %162, %14 : vector<1x384xf32>
    %164 = vector.extract_strided_slice %161 {offsets = [0, 0], sizes = [1, 128], strides = [1, 1]} : vector<1x384xf32> to vector<1x128xf32>
    %165 = vector.extract_strided_slice %163 {offsets = [0, 0], sizes = [1, 128], strides = [1, 1]} : vector<1x384xf32> to vector<1x128xf32>
    %166 = arith.addf %164, %165 : vector<1x128xf32>
    %167 = arith.negf %166 : vector<1x128xf32>
    %168 = math.exp %167 : vector<1x128xf32>
    %cst_34 = arith.constant 1.000000e+00 : f32
    %169 = vector.broadcast %cst_34 : f32 to vector<1x128xf32>
    %170 = arith.addf %169, %168 : vector<1x128xf32>
    %171 = arith.divf %169, %170 : vector<1x128xf32>
    %172 = vector.extract_strided_slice %161 {offsets = [0, 128], sizes = [1, 128], strides = [1, 1]} : vector<1x384xf32> to vector<1x128xf32>
    %173 = vector.extract_strided_slice %163 {offsets = [0, 128], sizes = [1, 128], strides = [1, 1]} : vector<1x384xf32> to vector<1x128xf32>
    %174 = arith.addf %172, %173 : vector<1x128xf32>
    %175 = arith.negf %174 : vector<1x128xf32>
    %176 = math.exp %175 : vector<1x128xf32>
    %cst_35 = arith.constant 1.000000e+00 : f32
    %177 = vector.broadcast %cst_35 : f32 to vector<1x128xf32>
    %178 = arith.addf %177, %176 : vector<1x128xf32>
    %179 = arith.divf %177, %178 : vector<1x128xf32>
    %180 = vector.extract_strided_slice %161 {offsets = [0, 256], sizes = [1, 128], strides = [1, 1]} : vector<1x384xf32> to vector<1x128xf32>
    %181 = vector.extract_strided_slice %163 {offsets = [0, 256], sizes = [1, 128], strides = [1, 1]} : vector<1x384xf32> to vector<1x128xf32>
    %182 = arith.mulf %171, %181 : vector<1x128xf32>
    %183 = arith.addf %180, %182 : vector<1x128xf32>
    %184 = math.tanh %183 : vector<1x128xf32>
    %cst_36 = arith.constant 1.000000e+00 : f32
    %185 = vector.broadcast %cst_36 : f32 to vector<1x128xf32>
    %186 = arith.subf %185, %179 : vector<1x128xf32>
    %187 = arith.mulf %186, %184 : vector<1x128xf32>
    %188 = arith.mulf %179, %160 : vector<1x128xf32>
    %189 = arith.addf %187, %188 : vector<1x128xf32>
    %190 = vector.extract_strided_slice %12 {offsets = [6, 0], sizes = [1, 384], strides = [1, 1]} : vector<8x384xf32> to vector<1x384xf32>
    %cst_37 = arith.constant dense<0.000000e+00> : vector<1x384xf32>
    %191 = tpu.matmul %189, %13, %cst_37 {dimension_numbers = #tpu.dot_dimension_numbers<[1], [0], [0], [1], [0, 0, 1, 1], [], []>} : vector<1x128xf32>, vector<128x384xf32>, vector<1x384xf32> -> vector<1x384xf32>
    %192 = arith.addf %191, %14 : vector<1x384xf32>
    %193 = vector.extract_strided_slice %190 {offsets = [0, 0], sizes = [1, 128], strides = [1, 1]} : vector<1x384xf32> to vector<1x128xf32>
    %194 = vector.extract_strided_slice %192 {offsets = [0, 0], sizes = [1, 128], strides = [1, 1]} : vector<1x384xf32> to vector<1x128xf32>
    %195 = arith.addf %193, %194 : vector<1x128xf32>
    %196 = arith.negf %195 : vector<1x128xf32>
    %197 = math.exp %196 : vector<1x128xf32>
    %cst_38 = arith.constant 1.000000e+00 : f32
    %198 = vector.broadcast %cst_38 : f32 to vector<1x128xf32>
    %199 = arith.addf %198, %197 : vector<1x128xf32>
    %200 = arith.divf %198, %199 : vector<1x128xf32>
    %201 = vector.extract_strided_slice %190 {offsets = [0, 128], sizes = [1, 128], strides = [1, 1]} : vector<1x384xf32> to vector<1x128xf32>
    %202 = vector.extract_strided_slice %192 {offsets = [0, 128], sizes = [1, 128], strides = [1, 1]} : vector<1x384xf32> to vector<1x128xf32>
    %203 = arith.addf %201, %202 : vector<1x128xf32>
    %204 = arith.negf %203 : vector<1x128xf32>
    %205 = math.exp %204 : vector<1x128xf32>
    %cst_39 = arith.constant 1.000000e+00 : f32
    %206 = vector.broadcast %cst_39 : f32 to vector<1x128xf32>
    %207 = arith.addf %206, %205 : vector<1x128xf32>
    %208 = arith.divf %206, %207 : vector<1x128xf32>
    %209 = vector.extract_strided_slice %190 {offsets = [0, 256], sizes = [1, 128], strides = [1, 1]} : vector<1x384xf32> to vector<1x128xf32>
    %210 = vector.extract_strided_slice %192 {offsets = [0, 256], sizes = [1, 128], strides = [1, 1]} : vector<1x384xf32> to vector<1x128xf32>
    %211 = arith.mulf %200, %210 : vector<1x128xf32>
    %212 = arith.addf %209, %211 : vector<1x128xf32>
    %213 = math.tanh %212 : vector<1x128xf32>
    %cst_40 = arith.constant 1.000000e+00 : f32
    %214 = vector.broadcast %cst_40 : f32 to vector<1x128xf32>
    %215 = arith.subf %214, %208 : vector<1x128xf32>
    %216 = arith.mulf %215, %213 : vector<1x128xf32>
    %217 = arith.mulf %208, %189 : vector<1x128xf32>
    %218 = arith.addf %216, %217 : vector<1x128xf32>
    %219 = vector.extract_strided_slice %12 {offsets = [7, 0], sizes = [1, 384], strides = [1, 1]} : vector<8x384xf32> to vector<1x384xf32>
    %cst_41 = arith.constant dense<0.000000e+00> : vector<1x384xf32>
    %220 = tpu.matmul %218, %13, %cst_41 {dimension_numbers = #tpu.dot_dimension_numbers<[1], [0], [0], [1], [0, 0, 1, 1], [], []>} : vector<1x128xf32>, vector<128x384xf32>, vector<1x384xf32> -> vector<1x384xf32>
    %221 = arith.addf %220, %14 : vector<1x384xf32>
    %222 = vector.extract_strided_slice %219 {offsets = [0, 0], sizes = [1, 128], strides = [1, 1]} : vector<1x384xf32> to vector<1x128xf32>
    %223 = vector.extract_strided_slice %221 {offsets = [0, 0], sizes = [1, 128], strides = [1, 1]} : vector<1x384xf32> to vector<1x128xf32>
    %224 = arith.addf %222, %223 : vector<1x128xf32>
    %225 = arith.negf %224 : vector<1x128xf32>
    %226 = math.exp %225 : vector<1x128xf32>
    %cst_42 = arith.constant 1.000000e+00 : f32
    %227 = vector.broadcast %cst_42 : f32 to vector<1x128xf32>
    %228 = arith.addf %227, %226 : vector<1x128xf32>
    %229 = arith.divf %227, %228 : vector<1x128xf32>
    %230 = vector.extract_strided_slice %219 {offsets = [0, 128], sizes = [1, 128], strides = [1, 1]} : vector<1x384xf32> to vector<1x128xf32>
    %231 = vector.extract_strided_slice %221 {offsets = [0, 128], sizes = [1, 128], strides = [1, 1]} : vector<1x384xf32> to vector<1x128xf32>
    %232 = arith.addf %230, %231 : vector<1x128xf32>
    %233 = arith.negf %232 : vector<1x128xf32>
    %234 = math.exp %233 : vector<1x128xf32>
    %cst_43 = arith.constant 1.000000e+00 : f32
    %235 = vector.broadcast %cst_43 : f32 to vector<1x128xf32>
    %236 = arith.addf %235, %234 : vector<1x128xf32>
    %237 = arith.divf %235, %236 : vector<1x128xf32>
    %238 = vector.extract_strided_slice %219 {offsets = [0, 256], sizes = [1, 128], strides = [1, 1]} : vector<1x384xf32> to vector<1x128xf32>
    %239 = vector.extract_strided_slice %221 {offsets = [0, 256], sizes = [1, 128], strides = [1, 1]} : vector<1x384xf32> to vector<1x128xf32>
    %240 = arith.mulf %229, %239 : vector<1x128xf32>
    %241 = arith.addf %238, %240 : vector<1x128xf32>
    %242 = math.tanh %241 : vector<1x128xf32>
    %cst_44 = arith.constant 1.000000e+00 : f32
    %243 = vector.broadcast %cst_44 : f32 to vector<1x128xf32>
    %244 = arith.subf %243, %237 : vector<1x128xf32>
    %245 = arith.mulf %244, %242 : vector<1x128xf32>
    %246 = arith.mulf %237, %218 : vector<1x128xf32>
    %247 = arith.addf %245, %246 : vector<1x128xf32>
    %248 = tpu.concatenate %44, %73, %102, %131, %160, %189, %218, %247 in 0 : vector<1x128xf32>, vector<1x128xf32>, vector<1x128xf32>, vector<1x128xf32>, vector<1x128xf32>, vector<1x128xf32>, vector<1x128xf32>, vector<1x128xf32> -> vector<8x128xf32>
    %c0_45 = arith.constant 0 : index
    %c0_46 = arith.constant 0 : index
    %249 = vector.load %arg6[%c0_45, %c0_46] : memref<128x8xf32, #tpu.memory_space<vmem>>, vector<128x8xf32>
    %cst_47 = arith.constant dense<0.000000e+00> : vector<8x8xf32>
    %250 = tpu.matmul %248, %249, %cst_47 {dimension_numbers = #tpu.dot_dimension_numbers<[1], [0], [0], [1], [0, 0, 1, 1], [], []>} : vector<8x128xf32>, vector<128x8xf32>, vector<8x8xf32> -> vector<8x8xf32>
    %c0_48 = arith.constant 0 : index
    %c0_49 = arith.constant 0 : index
    %251 = vector.load %arg7[%c0_48, %c0_49] : memref<1x8xf32, #tpu.memory_space<vmem>>, vector<1x8xf32>
    %252 = vector.broadcast %251 : vector<1x8xf32> to vector<8x8xf32>
    %253 = arith.addf %250, %252 : vector<8x8xf32>
    %cst_50 = arith.constant dense<0xFF800000> : vector<8xf32>
    %254 = vector.multi_reduction <maximumf>, %253, %cst_50 [1] : vector<8x8xf32> to vector<8xf32>
    %255 = vector.shape_cast %254 : vector<8xf32> to vector<8x1xf32>
    %256 = vector.broadcast %255 : vector<8x1xf32> to vector<8x8xf32>
    %257 = arith.subf %253, %256 : vector<8x8xf32>
    %258 = math.exp %257 : vector<8x8xf32>
    %cst_51 = arith.constant dense<0.000000e+00> : vector<8xf32>
    %259 = vector.multi_reduction <add>, %258, %cst_51 [1] : vector<8x8xf32> to vector<8xf32>
    %260 = vector.shape_cast %259 : vector<8xf32> to vector<8x1xf32>
    %261 = math.log %260 : vector<8x1xf32>
    %262 = vector.broadcast %261 : vector<8x1xf32> to vector<8x8xf32>
    %263 = arith.subf %257, %262 : vector<8x8xf32>
    %c0_52 = arith.constant 0 : index
    %c0_53 = arith.constant 0 : index
    %264 = vector.load %arg8[%c0_52, %c0_53] : memref<8x8xf32, #tpu.memory_space<vmem>>, vector<8x8xf32>
    tpu.vector_store %arg8[%c0_52, %c0_53], %263 {strides = array<i32>} : memref<8x8xf32, #tpu.memory_space<vmem>>, vector<8x8xf32>,
    return
  }
}

</mosaic_0001>

<llo_original>
// kernel: tpu_custom_call.1
$region0: #{tpu_custom_call.1}
  #allocation0 [shape = 'u32[]', space=smem, size = 0x4, offset = 0x4, fixed_abs, tag = 'smem constant byte address 0x4 - core index']
  #allocation1 [shape = 'u32[144,128]{1,0:T(1,128)}', space=vmem, size = 0x12000, scoped, tag = 'internal scratch']
  %s0 = inlined_call_operand.vmem [shape: s32[8,1], index: 0, kind: input, shape index: {}]
  %s1 = inlined_call_operand.vmem [shape: f32[20,16], index: 1, kind: input, shape index: {}]
  %s2 = inlined_call_operand.vmem [shape: f32[16,384], index: 2, kind: input, shape index: {}]
  %s3 = inlined_call_operand.hbm [shape: f32[128,384], index: 3, kind: input, shape index: {}]
  %s4 = inlined_call_operand.vmem [shape: f32[1,384], index: 4, kind: input, shape index: {}]
  %s5 = inlined_call_operand.vmem [shape: f32[1,384], index: 5, kind: input, shape index: {}]
  %s6 = inlined_call_operand.vmem [shape: f32[128,8], index: 6, kind: input, shape index: {}]
  %s7 = inlined_call_operand.vmem [shape: f32[1,8], index: 7, kind: input, shape index: {}]
  %s8 = inlined_call_operand.hbm [shape: f32[8,8], index: 8, kind: output, shape index: {}]
  %s9 = sld [smem:[#allocation0]]
  $region46: #{tpu_custom_call.1} parent=0
    _
  %s11 = ssub.s32 1, %s9
  %s12 = scalar_select 0, %s11, %s9
  $region1: #{tpu_custom_call.1} parent=0
    #allocation2 [shape = 'u8[196608]{0}', space=vmem, size = 0x30000, scoped, tag = 'input window, operand 3, single buffered']
    #allocation3 [shape = 's32[1]{0}', space=sflag, size = 0x4, scoped, tag = 'scoped memory for tpu_custom_call.1']
    #allocation4 [shape = 's32[1]{0}', space=sflag, size = 0x4, scoped, tag = 'scoped memory for tpu_custom_call.1']
    #allocation5 [shape = 'u8[4096]{0}', space=vmem, size = 0x1000, scoped, tag = 'output window, operand 0, single buffered']
    %13 = vsyncpa [#allocation3], 0
    %14 = vsyncpa [#allocation4], 0
    // Predicated region
    $region2: #{tpu_custom_call.1} parent=1 // pred_check
      _
    $region3: #{tpu_custom_call.1} parent=1 // pred_check_branch
      %16 = sbr.rel (0) target = $region5
    $region4: #{tpu_custom_call.1} parent=1 // pred_region
      _
    $region5: #{tpu_custom_call.1} parent=1 // pred_fallthru
      _
    // Predicated region
    $region6: #{tpu_custom_call.1} parent=1 // pred_check
      _
    $region7: #{tpu_custom_call.1} parent=1 // pred_check_branch
      %18 = sbr.rel (0) target = $region9
    $region8: #{tpu_custom_call.1} parent=1 // pred_region
      _
    $region9: #{tpu_custom_call.1} parent=1 // pred_fallthru
      _
    // Predicated region
    $region10: #{tpu_custom_call.1} parent=1 // pred_check
      _
    $region11: #{tpu_custom_call.1} parent=1 // pred_check_branch
      %20 = sbr.rel (0) target = $region13
    $region12: #{tpu_custom_call.1} parent=1 // pred_region
      _
    $region13: #{tpu_custom_call.1} parent=1 // pred_fallthru
      _
    // Predicated region
    $region14: #{tpu_custom_call.1} parent=1 // pred_check
      _
    $region15: #{tpu_custom_call.1} parent=1 // pred_check_branch
      %22 = sbr.rel (0) target = $region17
    $region16: #{tpu_custom_call.1} parent=1 // pred_region
      %s24 = ssub.s32 6144, 6144
      %25 = vsyncadd [#allocation3], %s24
      %s26 = sshll.u32 [#allocation2], 4
      %s27 = int_to_ptr.vmem [resolvable:$true] %s26
      %32 = dma.hbm_to_vmem [thread:$0]  %s3, 6144, %s27, [#allocation3], 384, 384, 24
    $region17: #{tpu_custom_call.1} parent=1 // pred_fallthru
      _
    // Predicated region
    $region18: #{tpu_custom_call.1} parent=1 // pred_check
      _
    $region19: #{tpu_custom_call.1} parent=1 // pred_check_branch
      %34 = sbr.rel (0) target = $region21
    $region20: #{tpu_custom_call.1} parent=1 // pred_region
      _
    $region21: #{tpu_custom_call.1} parent=1 // pred_fallthru
      _
    // Predicated region
    $region22: #{tpu_custom_call.1} parent=1 // pred_check
      _
    $region23: #{tpu_custom_call.1} parent=1 // pred_check_branch
      %36 = sbr.rel (0) target = $region25
    $region24: #{tpu_custom_call.1} parent=1 // pred_region
      _
    $region25: #{tpu_custom_call.1} parent=1 // pred_fallthru
      _
    // Predicated region
    $region26: #{tpu_custom_call.1} parent=1 // pred_check
      _
    $region27: #{tpu_custom_call.1} parent=1 // pred_check_branch
      %38 = sbr.rel (0) target = $region29
    $region28: #{tpu_custom_call.1} parent=1 // pred_region
      _
    $region29: #{tpu_custom_call.1} parent=1 // pred_fallthru
      _
    // Predicated region
    $region30: #{tpu_custom_call.1} parent=1 // pred_check
      _
    $region31: #{tpu_custom_call.1} parent=1 // pred_check_branch
      %40 = sbr.rel (0) target = $region33
    $region32: #{tpu_custom_call.1} parent=1 // pred_region
      _
    $region33: #{tpu_custom_call.1} parent=1 // pred_fallthru
      _
    // Predicated region
    $region34: #{tpu_custom_call.1} parent=1 // pred_check
      _
    $region35: #{tpu_custom_call.1} parent=1 // pred_check_branch
      %42 = sbr.rel (0) target = $region37
    $region36: #{tpu_custom_call.1} parent=1 // pred_region
      %43 = dma.done [#allocation3], 6144
    $region37: #{tpu_custom_call.1} parent=1 // pred_fallthru
      _
    %v44 = vld [vmem:[%s0] sm:$0xff]
    %v45 = vlaneseq
    %v46 = vand.u32 %v45, 127
    %47 = vset.pattern.permute.xlu0 0
    %48 = vperm.xlu0 %47, %v44
    %v49 = vpop.permute.xlu0 %48
    %vm50 = vcmp.eq.s32.totalorder %v46, %v49
    %v51 = vsel %vm50, 1, 0
    %v52 = vcvt.s32.f32 %v51
    %v53 = vld [vmem:[%s1] sm:$0xff]
    %v54 = vld [vmem:[%s1 + $0x8] sm:$0xff]
    %v55 = vld [vmem:[%s1 + $0x10] sm:$0xf]
    %vm56 = vcmask 162816
    %v58 = vsel %vm56, %v52, 0
    %vm60 = vcmask 1043456
    %v62 = vsel %vm60, %v55, 0
    %64 = vmatprep.subr.mxu0 0.0
    %65 = vmatpush1.msra.mxu0 %v53
    %66 = vmatprep.subr.mxu0 0.0
    %67 = vmatpush1.msra.mxu0 %v54
    %68 = vmatprep.subr.mxu0 0.0
    %69 = vmatpush1.msra.mxu0 %v62
    %70 = vmatprep.subr.mxu0 0.0
    %71 = vmatpush1.msra.mxu0 0.0
    %72 = vmatprep.subr.mxu0 0.0
    %73 = vmatpush1.msra.mxu0 0.0
    %74 = vmatprep.subr.mxu0 0.0
    %75 = vmatpush1.msra.mxu0 0.0
    %76 = vmatprep.subr.mxu0 0.0
    %77 = vmatpush1.msra.mxu0 0.0
    %78 = vmatprep.subr.mxu0 0.0
    %79 = vmatpush1.msra.mxu0 0.0
    %80 = vmatprep.subr.mxu0 0.0
    %81 = vmatpush1.msra.mxu0 0.0
    %82 = vmatprep.subr.mxu0 0.0
    %83 = vmatpush1.msra.mxu0 0.0
    %84 = vmatprep.subr.mxu0 0.0
    %85 = vmatpush1.msra.mxu0 0.0
    %86 = vmatprep.subr.mxu0 0.0
    %87 = vmatpush1.msra.mxu0 0.0
    %88 = vmatprep.subr.mxu0 0.0
    %89 = vmatpush1.msra.mxu0 0.0
    %90 = vmatprep.subr.mxu0 0.0
    %91 = vmatpush1.msra.mxu0 0.0
    %92 = vmatprep.subr.mxu0 0.0
    %93 = vmatpush1.msra.mxu0 0.0
    %94 = vmatprep.subr.mxu0 0.0
    %95 = vmatpush1.msra.mxu0 0.0
    %96 = vmatprep.subr.mxu0 0.0
    %97 = vmatpush1.msra.mxu0 0.0
    %98 = vmatprep.subr.mxu0 0.0
    %99 = vmatpush1.msra.mxu0 0.0
    %100 = vmatprep.subr.mxu0 0.0
    %101 = vmatpush1.msra.mxu0 0.0
    %102 = vmatprep.subr.mxu0 0.0
    %103 = vmatpush1.msra.mxu0 0.0
    %104 = vmatprep.subr.mxu0 0.0
    %105 = vmatpush1.msra.mxu0 0.0
    %106 = vmatprep.subr.mxu0 0.0
    %107 = vmatpush1.msra.mxu0 0.0
    %108 = vmatprep.subr.mxu0 0.0
    %109 = vmatpush1.msra.mxu0 0.0
    %110 = vmatprep.subr.mxu0 0.0
    %111 = vmatpush1.msra.mxu0 0.0
    %112 = vmatprep.subr.mxu0 0.0
    %113 = vmatpush1.msra.mxu0 0.0
    %114 = vmatprep.subr.mxu0 0.0
    %115 = vmatpush1.msra.mxu0 0.0
    %116 = vmatprep.subr.mxu0 0.0
    %117 = vmatpush1.msra.mxu0 0.0
    %118 = vmatprep.subr.mxu0 0.0
    %119 = vmatpush1.msra.mxu0 0.0
    %120 = vmatprep.subr.mxu0 0.0
    %121 = vmatpush1.msra.mxu0 0.0
    %122 = vmatprep.subr.mxu0 0.0
    %123 = vmatpush1.msra.mxu0 0.0
    %124 = vmatprep.subr.mxu0 0.0
    %125 = vmatpush1.msra.mxu0 0.0
    %126 = vmatprep.subr.mxu0 0.0
    %127 = vmatpush1.msra.mxu0 0.0
    %128 = vmatprep.mubr.f32.mxu0 0.0
    %129 = vmatmul.mubr.f32.gmra.mrb[0].mxu0 %v58
    %v130 = vpop.f32.mrb[0].mxu0
    %v131 = vadd.f32 0.0, %v130
    %v132 = vpop.f32.mrb[0].mxu0
    %133 = vdwg.mxu0
    %v134 = vld [vmem:[%s2] sm:$0xff]
    %v135 = vld [vmem:[%s2 + $0x8] sm:$0xff]
    %v136 = vld [vmem:[%s2 + $0x10] sm:$0xff]
    %v137 = vld [vmem:[%s2 + $0x18] sm:$0xff]
    %v138 = vld [vmem:[%s2 + $0x20] sm:$0xff]
    %v139 = vld [vmem:[%s2 + $0x28] sm:$0xff]
    %v140 = vld [vmem:[%s4] sm:$0x7]
    %v142 = vlaneseq
    %v143 = vshrl.u32 %v142, 7
    %v144 = vsub.s32 0, %v143
    %v145 = vrot.slane %v140, %v144
    %v146 = vlaneseq
    %v147 = vshrl.u32 %v146, 7
    %v148 = vsub.s32 1, %v147
    %v149 = vrot.slane %v140, %v148
    %v150 = vlaneseq
    %v151 = vshrl.u32 %v150, 7
    %v152 = vsub.s32 2, %v151
    %v153 = vrot.slane %v140, %v152
    %vm157 = vcmask 130048
    %v159 = vsel %vm157, %v131, 0
    %161 = vmatprep.subr.mxu0 %v135
    %162 = vmatpush1.msra.mxu0 %v134
    %163 = vmatprep.subr.mxu0 %v138
    %164 = vmatpush1.msra.mxu0 %v137
    %165 = vmatprep.subr.mxu0 0.0
    %166 = vmatpush1.msra.mxu0 0.0
    %167 = vmatprep.subr.mxu0 0.0
    %168 = vmatpush1.msra.mxu0 0.0
    %169 = vmatprep.subr.mxu0 0.0
    %170 = vmatpush1.msra.mxu0 0.0
    %171 = vmatprep.subr.mxu0 0.0
    %172 = vmatpush1.msra.mxu0 0.0
    %173 = vmatprep.subr.mxu0 0.0
    %174 = vmatpush1.msra.mxu0 0.0
    %175 = vmatprep.subr.mxu0 0.0
    %176 = vmatpush1.msra.mxu0 0.0
    %177 = vmatprep.subr.mxu0 0.0
    %178 = vmatpush1.msra.mxu0 0.0
    %179 = vmatprep.subr.mxu0 0.0
    %180 = vmatpush1.msra.mxu0 0.0
    %181 = vmatprep.subr.mxu0 0.0
    %182 = vmatpush1.msra.mxu0 0.0
    %183 = vmatprep.subr.mxu0 0.0
    %184 = vmatpush1.msra.mxu0 0.0
    %185 = vmatprep.subr.mxu0 0.0
    %186 = vmatpush1.msra.mxu0 0.0
    %187 = vmatprep.subr.mxu0 0.0
    %188 = vmatpush1.msra.mxu0 0.0
    %189 = vmatprep.subr.mxu0 0.0
    %190 = vmatpush1.msra.mxu0 0.0
    %191 = vmatprep.subr.mxu0 0.0
    %192 = vmatpush1.msra.mxu0 0.0
    %193 = vmatprep.subr.mxu0 0.0
    %194 = vmatpush1.msra.mxu0 0.0
    %195 = vmatprep.subr.mxu0 0.0
    %196 = vmatpush1.msra.mxu0 0.0
    %197 = vmatprep.subr.mxu0 0.0
    %198 = vmatpush1.msra.mxu0 0.0
    %199 = vmatprep.subr.mxu0 0.0
    %200 = vmatpush1.msra.mxu0 0.0
    %201 = vmatprep.subr.mxu0 0.0
    %202 = vmatpush1.msra.mxu0 0.0
    %203 = vmatprep.subr.mxu0 0.0
    %204 = vmatpush1.msra.mxu0 0.0
    %205 = vmatprep.subr.mxu0 0.0
    %206 = vmatpush1.msra.mxu0 0.0
    %207 = vmatprep.subr.mxu0 0.0
    %208 = vmatpush1.msra.mxu0 0.0
    %209 = vmatprep.subr.mxu0 0.0
    %210 = vmatpush1.msra.mxu0 0.0
    %211 = vmatprep.subr.mxu0 0.0
    %212 = vmatpush1.msra.mxu0 0.0
    %213 = vmatprep.subr.mxu0 0.0
    %214 = vmatpush1.msra.mxu0 0.0
    %215 = vmatprep.subr.mxu0 0.0
    %216 = vmatpush1.msra.mxu0 0.0
    %217 = vmatprep.subr.mxu0 0.0
    %218 = vmatpush1.msra.mxu0 0.0
    %219 = vmatprep.subr.mxu0 0.0
    %220 = vmatpush1.msra.mxu0 0.0
    %221 = vmatprep.subr.mxu0 0.0
    %222 = vmatpush1.msra.mxu0 0.0
    %223 = vmatprep.subr.mxu0 0.0
    %224 = vmatpush1.msra.mxu0 0.0
    %225 = vmatprep.mubr.f32.mxu0 0.0
    %226 = vmatmul.mubr.f32.gmra.mrb[0].mxu0 %v159
    %v227 = vpop.f32.mrb[0].mxu0
    %v228 = vadd.f32 %v145, %v227
    %v229 = vpop.f32.mrb[0].mxu0
    %v230 = vadd.f32 %v149, %v229
    %231 = vdwg.mxu0
    %232 = vmatprep.subr.mxu0 0.0
    %233 = vmatpush1.msra.mxu0 %v136
    %234 = vmatprep.subr.mxu0 0.0
    %235 = vmatpush1.msra.mxu0 %v139
    %236 = vmatprep.subr.mxu0 0.0
    %237 = vmatpush1.msra.mxu0 0.0
    %238 = vmatprep.subr.mxu0 0.0
    %239 = vmatpush1.msra.mxu0 0.0
    %240 = vmatprep.subr.mxu0 0.0
    %241 = vmatpush1.msra.mxu0 0.0
    %242 = vmatprep.subr.mxu0 0.0
    %243 = vmatpush1.msra.mxu0 0.0
    %244 = vmatprep.subr.mxu0 0.0
    %245 = vmatpush1.msra.mxu0 0.0
    %246 = vmatprep.subr.mxu0 0.0
    %247 = vmatpush1.msra.mxu0 0.0
    %248 = vmatprep.subr.mxu0 0.0
    %249 = vmatpush1.msra.mxu0 0.0
    %250 = vmatprep.subr.mxu0 0.0
    %251 = vmatpush1.msra.mxu0 0.0
    %252 = vmatprep.subr.mxu0 0.0
    %253 = vmatpush1.msra.mxu0 0.0
    %254 = vmatprep.subr.mxu0 0.0
    %255 = vmatpush1.msra.mxu0 0.0
    %256 = vmatprep.subr.mxu0 0.0
    %257 = vmatpush1.msra.mxu0 0.0
    %258 = vmatprep.subr.mxu0 0.0
    %259 = vmatpush1.msra.mxu0 0.0
    %260 = vmatprep.subr.mxu0 0.0
    %261 = vmatpush1.msra.mxu0 0.0
    %262 = vmatprep.subr.mxu0 0.0
    %263 = vmatpush1.msra.mxu0 0.0
    %264 = vmatprep.subr.mxu0 0.0
    %265 = vmatpush1.msra.mxu0 0.0
    %266 = vmatprep.subr.mxu0 0.0
    %267 = vmatpush1.msra.mxu0 0.0
    %268 = vmatprep.subr.mxu0 0.0
    %269 = vmatpush1.msra.mxu0 0.0
    %270 = vmatprep.subr.mxu0 0.0
    %271 = vmatpush1.msra.mxu0 0.0
    %272 = vmatprep.subr.mxu0 0.0
    %273 = vmatpush1.msra.mxu0 0.0
    %274 = vmatprep.subr.mxu0 0.0
    %275 = vmatpush1.msra.mxu0 0.0
    %276 = vmatprep.subr.mxu0 0.0
    %277 = vmatpush1.msra.mxu0 0.0
    %278 = vmatprep.subr.mxu0 0.0
    %279 = vmatpush1.msra.mxu0 0.0
    %280 = vmatprep.subr.mxu0 0.0
    %281 = vmatpush1.msra.mxu0 0.0
    %282 = vmatprep.subr.mxu0 0.0
    %283 = vmatpush1.msra.mxu0 0.0
    %284 = vmatprep.subr.mxu0 0.0
    %285 = vmatpush1.msra.mxu0 0.0
    %286 = vmatprep.subr.mxu0 0.0
    %287 = vmatpush1.msra.mxu0 0.0
    %288 = vmatprep.subr.mxu0 0.0
    %289 = vmatpush1.msra.mxu0 0.0
    %290 = vmatprep.subr.mxu0 0.0
    %291 = vmatpush1.msra.mxu0 0.0
    %292 = vmatprep.subr.mxu0 0.0
    %293 = vmatpush1.msra.mxu0 0.0
    %294 = vmatprep.subr.mxu0 0.0
    %295 = vmatpush1.msra.mxu0 0.0
    %296 = vmatprep.mubr.f32.mxu0 0.0
    %297 = vmatmul.mubr.f32.gmra.mrb[0].mxu0 %v159
    %v298 = vpop.f32.mrb[0].mxu0
    %v299 = vadd.f32 %v153, %v298
    %v300 = vpop.f32.mrb[0].mxu0
    %301 = vdwg.mxu0
    %v302 = vld [vmem:[#allocation2] sm:$0xff]
    %v303 = vld [vmem:[#allocation2 + $0x8] sm:$0xff]
    %v304 = vld [vmem:[#allocation2 + $0x10] sm:$0xff]
    %v305 = vld [vmem:[#allocation2 + $0x18] sm:$0xff]
    %v306 = vld [vmem:[#allocation2 + $0x20] sm:$0xff]
    %v307 = vld [vmem:[#allocation2 + $0x28] sm:$0xff]
    %v308 = vld [vmem:[#allocation2 + $0x30] sm:$0xff]
    %v309 = vld [vmem:[#allocation2 + $0x38] sm:$0xff]
    %v310 = vld [vmem:[#allocation2 + $0x40] sm:$0xff]
    %v311 = vld [vmem:[#allocation2 + $0x48] sm:$0xff]
    %v312 = vld [vmem:[#allocation2 + $0x50] sm:$0xff]
    %v313 = vld [vmem:[#allocation2 + $0x58] sm:$0xff]
    %v314 = vld [vmem:[#allocation2 + $0x60] sm:$0xff]
    %v315 = vld [vmem:[#allocation2 + $0x68] sm:$0xff]
    %v316 = vld [vmem:[#allocation2 + $0x70] sm:$0xff]
    %v317 = vld [vmem:[#allocation2 + $0x78] sm:$0xff]
    %v318 = vld [vmem:[#allocation2 + $0x80] sm:$0xff]
    %v319 = vld [vmem:[#allocation2 + $0x88] sm:$0xff]
    %v320 = vld [vmem:[#allocation2 + $0x90] sm:$0xff]
    %v321 = vld [vmem:[#allocation2 + $0x98] sm:$0xff]
    %v322 = vld [vmem:[#allocation2 + $0xa0] sm:$0xff]
    %v323 = vld [vmem:[#allocation2 + $0xa8] sm:$0xff]
    %v324 = vld [vmem:[#allocation2 + $0xb0] sm:$0xff]
    %v325 = vld [vmem:[#allocation2 + $0xb8] sm:$0xff]
    %v326 = vld [vmem:[#allocation2 + $0xc0] sm:$0xff]
    %v327 = vld [vmem:[#allocation2 + $0xc8] sm:$0xff]
    %v328 = vld [vmem:[#allocation2 + $0xd0] sm:$0xff]
    %v329 = vld [vmem:[#allocation2 + $0xd8] sm:$0xff]
    %v330 = vld [vmem:[#allocation2 + $0xe0] sm:$0xff]
    %v331 = vld [vmem:[#allocation2 + $0xe8] sm:$0xff]
    %v332 = vld [vmem:[#allocation2 + $0xf0] sm:$0xff]
    %v333 = vld [vmem:[#allocation2 + $0xf8] sm:$0xff]
    %v334 = vld [vmem:[#allocation2 + $0x100] sm:$0xff]
    %v335 = vld [vmem:[#allocation2 + $0x108] sm:$0xff]
    %v336 = vld [vmem:[#allocation2 + $0x110] sm:$0xff]
    %v337 = vld [vmem:[#allocation2 + $0x118] sm:$0xff]
    %v338 = vld [vmem:[#allocation2 + $0x120] sm:$0xff]
    %v339 = vld [vmem:[#allocation2 + $0x128] sm:$0xff]
    %v340 = vld [vmem:[#allocation2 + $0x130] sm:$0xff]
    %v341 = vld [vmem:[#allocation2 + $0x138] sm:$0xff]
    %v342 = vld [vmem:[#allocation2 + $0x140] sm:$0xff]
    %v343 = vld [vmem:[#allocation2 + $0x148] sm:$0xff]
    %v344 = vld [vmem:[#allocation2 + $0x150] sm:$0xff]
    %v345 = vld [vmem:[#allocation2 + $0x158] sm:$0xff]
    %v346 = vld [vmem:[#allocation2 + $0x160] sm:$0xff]
    %v347 = vld [vmem:[#allocation2 + $0x168] sm:$0xff]
    %v348 = vld [vmem:[#allocation2 + $0x170] sm:$0xff]
    %v349 = vld [vmem:[#allocation2 + $0x178] sm:$0xff]
    %v350 = vld [vmem:[%s5] sm:$0x7]
    %v352 = vlaneseq
    %v353 = vshrl.u32 %v352, 7
    %v354 = vsub.s32 0, %v353
    %v355 = vrot.slane %v350, %v354
    %v356 = vlaneseq
    %v357 = vshrl.u32 %v356, 7
    %v358 = vsub.s32 1, %v357
    %v359 = vrot.slane %v350, %v358
    %v360 = vlaneseq
    %v361 = vshrl.u32 %v360, 7
    %v362 = vsub.s32 2, %v361
    %v363 = vrot.slane %v350, %v362
    %367 = vmatprep.subr.mxu0 %v303
    %368 = vmatpush1.msra.mxu0 %v302
    %369 = vmatprep.subr.mxu0 %v306
    %370 = vmatpush1.msra.mxu0 %v305
    %371 = vmatprep.subr.mxu0 %v309
    %372 = vmatpush1.msra.mxu0 %v308
    %373 = vmatprep.subr.mxu0 %v312
    %374 = vmatpush1.msra.mxu0 %v311
    %375 = vmatprep.subr.mxu0 %v315
    %376 = vmatpush1.msra.mxu0 %v314
    %377 = vmatprep.subr.mxu0 %v318
    %378 = vmatpush1.msra.mxu0 %v317
    %379 = vmatprep.subr.mxu0 %v321
    %380 = vmatpush1.msra.mxu0 %v320
    %381 = vmatprep.subr.mxu0 %v324
    %382 = vmatpush1.msra.mxu0 %v323
    %383 = vmatprep.subr.mxu0 %v327
    %384 = vmatpush1.msra.mxu0 %v326
    %385 = vmatprep.subr.mxu0 %v330
    %386 = vmatpush1.msra.mxu0 %v329
    %387 = vmatprep.subr.mxu0 %v333
    %388 = vmatpush1.msra.mxu0 %v332
    %389 = vmatprep.subr.mxu0 %v336
    %390 = vmatpush1.msra.mxu0 %v335
    %391 = vmatprep.subr.mxu0 %v339
    %392 = vmatpush1.msra.mxu0 %v338
    %393 = vmatprep.subr.mxu0 %v342
    %394 = vmatpush1.msra.mxu0 %v341
    %395 = vmatprep.subr.mxu0 %v345
    %396 = vmatpush1.msra.mxu0 %v344
    %397 = vmatprep.subr.mxu0 %v348
    %398 = vmatpush1.msra.mxu0 %v347
    %399 = vmatprep.subr.mxu0 0.0
    %400 = vmatpush1.msra.mxu0 0.0
    %401 = vmatprep.subr.mxu0 0.0
    %402 = vmatpush1.msra.mxu0 0.0
    %403 = vmatprep.subr.mxu0 0.0
    %404 = vmatpush1.msra.mxu0 0.0
    %405 = vmatprep.subr.mxu0 0.0
    %406 = vmatpush1.msra.mxu0 0.0
    %407 = vmatprep.subr.mxu0 0.0
    %408 = vmatpush1.msra.mxu0 0.0
    %409 = vmatprep.subr.mxu0 0.0
    %410 = vmatpush1.msra.mxu0 0.0
    %411 = vmatprep.subr.mxu0 0.0
    %412 = vmatpush1.msra.mxu0 0.0
    %413 = vmatprep.subr.mxu0 0.0
    %414 = vmatpush1.msra.mxu0 0.0
    %415 = vmatprep.subr.mxu0 0.0
    %416 = vmatpush1.msra.mxu0 0.0
    %417 = vmatprep.subr.mxu0 0.0
    %418 = vmatpush1.msra.mxu0 0.0
    %419 = vmatprep.subr.mxu0 0.0
    %420 = vmatpush1.msra.mxu0 0.0
    %421 = vmatprep.subr.mxu0 0.0
    %422 = vmatpush1.msra.mxu0 0.0
    %423 = vmatprep.subr.mxu0 0.0
    %424 = vmatpush1.msra.mxu0 0.0
    %425 = vmatprep.subr.mxu0 0.0
    %426 = vmatpush1.msra.mxu0 0.0
    %427 = vmatprep.subr.mxu0 0.0
    %428 = vmatpush1.msra.mxu0 0.0
    %429 = vmatprep.subr.mxu0 0.0
    %430 = vmatpush1.msra.mxu0 0.0
    %431 = vmatprep.mubr.f32.mxu0 0.0
    %432 = vmatmul.mubr.f32.gmra.mrb[0].mxu0 0.0
    %v433 = vpop.f32.mrb[0].mxu0
    %v434 = vadd.f32 %v355, %v433
    %v435 = vpop.f32.mrb[0].mxu0
    %v436 = vadd.f32 %v359, %v435
    %437 = vdwg.mxu0
    %438 = vmatprep.subr.mxu0 0.0
    %439 = vmatpush1.msra.mxu0 %v304
    %440 = vmatprep.subr.mxu0 0.0
    %441 = vmatpush1.msra.mxu0 %v307
    %442 = vmatprep.subr.mxu0 0.0
    %443 = vmatpush1.msra.mxu0 %v310
    %444 = vmatprep.subr.mxu0 0.0
    %445 = vmatpush1.msra.mxu0 %v313
    %446 = vmatprep.subr.mxu0 0.0
    %447 = vmatpush1.msra.mxu0 %v316
    %448 = vmatprep.subr.mxu0 0.0
    %449 = vmatpush1.msra.mxu0 %v319
    %450 = vmatprep.subr.mxu0 0.0
    %451 = vmatpush1.msra.mxu0 %v322
    %452 = vmatprep.subr.mxu0 0.0
    %453 = vmatpush1.msra.mxu0 %v325
    %454 = vmatprep.subr.mxu0 0.0
    %455 = vmatpush1.msra.mxu0 %v328
    %456 = vmatprep.subr.mxu0 0.0
    %457 = vmatpush1.msra.mxu0 %v331
    %458 = vmatprep.subr.mxu0 0.0
    %459 = vmatpush1.msra.mxu0 %v334
    %460 = vmatprep.subr.mxu0 0.0
    %461 = vmatpush1.msra.mxu0 %v337
    %462 = vmatprep.subr.mxu0 0.0
    %463 = vmatpush1.msra.mxu0 %v340
    %464 = vmatprep.subr.mxu0 0.0
    %465 = vmatpush1.msra.mxu0 %v343
    %466 = vmatprep.subr.mxu0 0.0
    %467 = vmatpush1.msra.mxu0 %v346
    %468 = vmatprep.subr.mxu0 0.0
    %469 = vmatpush1.msra.mxu0 %v349
    %470 = vmatprep.subr.mxu0 0.0
    %471 = vmatpush1.msra.mxu0 0.0
    %472 = vmatprep.subr.mxu0 0.0
    %473 = vmatpush1.msra.mxu0 0.0
    %474 = vmatprep.subr.mxu0 0.0
    %475 = vmatpush1.msra.mxu0 0.0
    %476 = vmatprep.subr.mxu0 0.0
    %477 = vmatpush1.msra.mxu0 0.0
    %478 = vmatprep.subr.mxu0 0.0
    %479 = vmatpush1.msra.mxu0 0.0
    %480 = vmatprep.subr.mxu0 0.0
    %481 = vmatpush1.msra.mxu0 0.0
    %482 = vmatprep.subr.mxu0 0.0
    %483 = vmatpush1.msra.mxu0 0.0
    %484 = vmatprep.subr.mxu0 0.0
    %485 = vmatpush1.msra.mxu0 0.0
    %486 = vmatprep.subr.mxu0 0.0
    %487 = vmatpush1.msra.mxu0 0.0
    %488 = vmatprep.subr.mxu0 0.0
    %489 = vmatpush1.msra.mxu0 0.0
    %490 = vmatprep.subr.mxu0 0.0
    %491 = vmatpush1.msra.mxu0 0.0
    %492 = vmatprep.subr.mxu0 0.0
    %493 = vmatpush1.msra.mxu0 0.0
    %494 = vmatprep.subr.mxu0 0.0
    %495 = vmatpush1.msra.mxu0 0.0
    %496 = vmatprep.subr.mxu0 0.0
    %497 = vmatpush1.msra.mxu0 0.0
    %498 = vmatprep.subr.mxu0 0.0
    %499 = vmatpush1.msra.mxu0 0.0
    %500 = vmatprep.subr.mxu0 0.0
    %501 = vmatpush1.msra.mxu0 0.0
    %502 = vmatprep.mubr.f32.mxu0 0.0
    %503 = vmatmul.mubr.f32.gmra.mrb[0].mxu0 0.0
    %v504 = vpop.f32.mrb[0].mxu0
    %v505 = vadd.f32 %v363, %v504
    %v506 = vpop.f32.mrb[0].mxu0
    %507 = vdwg.mxu0
    %v508 = vadd.f32 %v228, %v434
    %v509 = vxor.u32 %v508, 2147483648
    %v510 = vmul.f32 %v509, 1.442695
    %v511 = vpow.pop %v510
    %v512 = vadd.f32 %v511, 1.0
    %v513 = vrcp.pop %v512
    %v514 = vmul.f32 1.0, %v513
    %v515 = vadd.f32 %v230, %v436
    %v516 = vxor.u32 %v515, 2147483648
    %v517 = vmul.f32 %v516, 1.442695
    %v518 = vpow.pop %v517
    %v519 = vadd.f32 %v518, 1.0
    %v520 = vrcp.pop %v519
    %v521 = vmul.f32 1.0, %v520
    %v522 = vmul.f32 %v514, %v505
    %v523 = vadd.f32 %v299, %v522
    %v524 = vtanh.pop %v523
    %v525 = vsub.f32 1.0, %v521
    %v526 = vmul.f32 %v525, %v524
    %v527 = vmul.f32 %v521, 0.0
    %v528 = vadd.f32 %v526, %v527
    %529 = vmatprep.subr.mxu0 %v303
    %530 = vmatpush1.msra.mxu0 %v302
    %531 = vmatprep.subr.mxu0 %v306
    %532 = vmatpush1.msra.mxu0 %v305
    %533 = vmatprep.subr.mxu0 %v309
    %534 = vmatpush1.msra.mxu0 %v308
    %535 = vmatprep.subr.mxu0 %v312
    %536 = vmatpush1.msra.mxu0 %v311
    %537 = vmatprep.subr.mxu0 %v315
    %538 = vmatpush1.msra.mxu0 %v314
    %539 = vmatprep.subr.mxu0 %v318
    %540 = vmatpush1.msra.mxu0 %v317
    %541 = vmatprep.subr.mxu0 %v321
    %542 = vmatpush1.msra.mxu0 %v320
    %543 = vmatprep.subr.mxu0 %v324
    %544 = vmatpush1.msra.mxu0 %v323
    %545 = vmatprep.subr.mxu0 %v327
    %546 = vmatpush1.msra.mxu0 %v326
    %547 = vmatprep.subr.mxu0 %v330
    %548 = vmatpush1.msra.mxu0 %v329
    %549 = vmatprep.subr.mxu0 %v333
    %550 = vmatpush1.msra.mxu0 %v332
    %551 = vmatprep.subr.mxu0 %v336
    %552 = vmatpush1.msra.mxu0 %v335
    %553 = vmatprep.subr.mxu0 %v339
    %554 = vmatpush1.msra.mxu0 %v338
    %555 = vmatprep.subr.mxu0 %v342
    %556 = vmatpush1.msra.mxu0 %v341
    %557 = vmatprep.subr.mxu0 %v345
    %558 = vmatpush1.msra.mxu0 %v344
    %559 = vmatprep.subr.mxu0 %v348
    %560 = vmatpush1.msra.mxu0 %v347
    %561 = vmatprep.subr.mxu0 0.0
    %562 = vmatpush1.msra.mxu0 0.0
    %563 = vmatprep.subr.mxu0 0.0
    %564 = vmatpush1.msra.mxu0 0.0
    %565 = vmatprep.subr.mxu0 0.0
    %566 = vmatpush1.msra.mxu0 0.0
    %567 = vmatprep.subr.mxu0 0.0
    %568 = vmatpush1.msra.mxu0 0.0
    %569 = vmatprep.subr.mxu0 0.0
    %570 = vmatpush1.msra.mxu0 0.0
    %571 = vmatprep.subr.mxu0 0.0
    %572 = vmatpush1.msra.mxu0 0.0
    %573 = vmatprep.subr.mxu0 0.0
    %574 = vmatpush1.msra.mxu0 0.0
    %575 = vmatprep.subr.mxu0 0.0
    %576 = vmatpush1.msra.mxu0 0.0
    %577 = vmatprep.subr.mxu0 0.0
    %578 = vmatpush1.msra.mxu0 0.0
    %579 = vmatprep.subr.mxu0 0.0
    %580 = vmatpush1.msra.mxu0 0.0
    %581 = vmatprep.subr.mxu0 0.0
    %582 = vmatpush1.msra.mxu0 0.0
    %583 = vmatprep.subr.mxu0 0.0
    %584 = vmatpush1.msra.mxu0 0.0
    %585 = vmatprep.subr.mxu0 0.0
    %586 = vmatpush1.msra.mxu0 0.0
    %587 = vmatprep.subr.mxu0 0.0
    %588 = vmatpush1.msra.mxu0 0.0
    %589 = vmatprep.subr.mxu0 0.0
    %590 = vmatpush1.msra.mxu0 0.0
    %591 = vmatprep.subr.mxu0 0.0
    %592 = vmatpush1.msra.mxu0 0.0
    %593 = vmatprep.mubr.f32.mxu0 0.0
    %594 = vmatmul.mubr.f32.gmra.mrb[0].mxu0 %v528
    %v595 = vpop.f32.mrb[0].mxu0
    %v596 = vadd.f32 %v355, %v595
    %v597 = vpop.f32.mrb[0].mxu0
    %v598 = vadd.f32 %v359, %v597
    %599 = vdwg.mxu0
    %600 = vmatprep.subr.mxu0 0.0
    %601 = vmatpush1.msra.mxu0 %v304
    %602 = vmatprep.subr.mxu0 0.0
    %603 = vmatpush1.msra.mxu0 %v307
    %604 = vmatprep.subr.mxu0 0.0
    %605 = vmatpush1.msra.mxu0 %v310
    %606 = vmatprep.subr.mxu0 0.0
    %607 = vmatpush1.msra.mxu0 %v313
    %608 = vmatprep.subr.mxu0 0.0
    %609 = vmatpush1.msra.mxu0 %v316
    %610 = vmatprep.subr.mxu0 0.0
    %611 = vmatpush1.msra.mxu0 %v319
    %612 = vmatprep.subr.mxu0 0.0
    %613 = vmatpush1.msra.mxu0 %v322
    %614 = vmatprep.subr.mxu0 0.0
    %615 = vmatpush1.msra.mxu0 %v325
    %616 = vmatprep.subr.mxu0 0.0
    %617 = vmatpush1.msra.mxu0 %v328
    %618 = vmatprep.subr.mxu0 0.0
    %619 = vmatpush1.msra.mxu0 %v331
    %620 = vmatprep.subr.mxu0 0.0
    %621 = vmatpush1.msra.mxu0 %v334
    %622 = vmatprep.subr.mxu0 0.0
    %623 = vmatpush1.msra.mxu0 %v337
    %624 = vmatprep.subr.mxu0 0.0
    %625 = vmatpush1.msra.mxu0 %v340
    %626 = vmatprep.subr.mxu0 0.0
    %627 = vmatpush1.msra.mxu0 %v343
    %628 = vmatprep.subr.mxu0 0.0
    %629 = vmatpush1.msra.mxu0 %v346
    %630 = vmatprep.subr.mxu0 0.0
    %631 = vmatpush1.msra.mxu0 %v349
    %632 = vmatprep.subr.mxu0 0.0
    %633 = vmatpush1.msra.mxu0 0.0
    %634 = vmatprep.subr.mxu0 0.0
    %635 = vmatpush1.msra.mxu0 0.0
    %636 = vmatprep.subr.mxu0 0.0
    %637 = vmatpush1.msra.mxu0 0.0
    %638 = vmatprep.subr.mxu0 0.0
    %639 = vmatpush1.msra.mxu0 0.0
    %640 = vmatprep.subr.mxu0 0.0
    %641 = vmatpush1.msra.mxu0 0.0
    %642 = vmatprep.subr.mxu0 0.0
    %643 = vmatpush1.msra.mxu0 0.0
    %644 = vmatprep.subr.mxu0 0.0
    %645 = vmatpush1.msra.mxu0 0.0
    %646 = vmatprep.subr.mxu0 0.0
    %647 = vmatpush1.msra.mxu0 0.0
    %648 = vmatprep.subr.mxu0 0.0
    %649 = vmatpush1.msra.mxu0 0.0
    %650 = vmatprep.subr.mxu0 0.0
    %651 = vmatpush1.msra.mxu0 0.0
    %652 = vmatprep.subr.mxu0 0.0
    %653 = vmatpush1.msra.mxu0 0.0
    %654 = vmatprep.subr.mxu0 0.0
    %655 = vmatpush1.msra.mxu0 0.0
    %656 = vmatprep.subr.mxu0 0.0
    %657 = vmatpush1.msra.mxu0 0.0
    %658 = vmatprep.subr.mxu0 0.0
    %659 = vmatpush1.msra.mxu0 0.0
    %660 = vmatprep.subr.mxu0 0.0
    %661 = vmatpush1.msra.mxu0 0.0
    %662 = vmatprep.subr.mxu0 0.0
    %663 = vmatpush1.msra.mxu0 0.0
    %664 = vmatprep.mubr.f32.mxu0 0.0
    %665 = vmatmul.mubr.f32.gmra.mrb[0].mxu0 %v528
    %v666 = vpop.f32.mrb[0].mxu0
    %v667 = vadd.f32 %v363, %v666
    %v668 = vpop.f32.mrb[0].mxu0
    %669 = vdwg.mxu0
    %v671 = vrot.slane %v596, 7
    %v673 = vadd.f32 %v228, %v671
    %v674 = vxor.u32 %v673, 2147483648
    %v675 = vmul.f32 %v674, 1.442695
    %v676 = vpow.pop %v675
    %v677 = vadd.f32 %v676, 1.0
    %v678 = vrcp.pop %v677
    %v679 = vmul.f32 1.0, %v678
    %v681 = vrot.slane %v598, 7
    %v683 = vadd.f32 %v230, %v681
    %v684 = vxor.u32 %v683, 2147483648
    %v685 = vmul.f32 %v684, 1.442695
    %v686 = vpow.pop %v685
    %v687 = vadd.f32 %v686, 1.0
    %v688 = vrcp.pop %v687
    %v689 = vmul.f32 1.0, %v688
    %v691 = vrot.slane %v667, 7
    %v693 = vmul.f32 %v679, %v691
    %v694 = vadd.f32 %v299, %v693
    %v695 = vtanh.pop %v694
    %v696 = vsub.f32 1.0, %v689
    %v697 = vmul.f32 %v696, %v695
    %v699 = vrot.slane %v528, 7
    %v701 = vmul.f32 %v689, %v699
    %v702 = vadd.f32 %v697, %v701
    %v704 = vrot.slane %v702, 1
    %706 = vmatprep.subr.mxu0 %v303
    %707 = vmatpush1.msra.mxu0 %v302
    %708 = vmatprep.subr.mxu0 %v306
    %709 = vmatpush1.msra.mxu0 %v305
    %710 = vmatprep.subr.mxu0 %v309
    %711 = vmatpush1.msra.mxu0 %v308
    %712 = vmatprep.subr.mxu0 %v312
    %713 = vmatpush1.msra.mxu0 %v311
    %714 = vmatprep.subr.mxu0 %v315
    %715 = vmatpush1.msra.mxu0 %v314
    %716 = vmatprep.subr.mxu0 %v318
    %717 = vmatpush1.msra.mxu0 %v317
    %718 = vmatprep.subr.mxu0 %v321
    %719 = vmatpush1.msra.mxu0 %v320
    %720 = vmatprep.subr.mxu0 %v324
    %721 = vmatpush1.msra.mxu0 %v323
    %722 = vmatprep.subr.mxu0 %v327
    %723 = vmatpush1.msra.mxu0 %v326
    %724 = vmatprep.subr.mxu0 %v330
    %725 = vmatpush1.msra.mxu0 %v329
    %726 = vmatprep.subr.mxu0 %v333
    %727 = vmatpush1.msra.mxu0 %v332
    %728 = vmatprep.subr.mxu0 %v336
    %729 = vmatpush1.msra.mxu0 %v335
    %730 = vmatprep.subr.mxu0 %v339
    %731 = vmatpush1.msra.mxu0 %v338
    %732 = vmatprep.subr.mxu0 %v342
    %733 = vmatpush1.msra.mxu0 %v341
    %734 = vmatprep.subr.mxu0 %v345
    %735 = vmatpush1.msra.mxu0 %v344
    %736 = vmatprep.subr.mxu0 %v348
    %737 = vmatpush1.msra.mxu0 %v347
    %738 = vmatprep.subr.mxu0 0.0
    %739 = vmatpush1.msra.mxu0 0.0
    %740 = vmatprep.subr.mxu0 0.0
    %741 = vmatpush1.msra.mxu0 0.0
    %742 = vmatprep.subr.mxu0 0.0
    %743 = vmatpush1.msra.mxu0 0.0
    %744 = vmatprep.subr.mxu0 0.0
    %745 = vmatpush1.msra.mxu0 0.0
    %746 = vmatprep.subr.mxu0 0.0
    %747 = vmatpush1.msra.mxu0 0.0
    %748 = vmatprep.subr.mxu0 0.0
    %749 = vmatpush1.msra.mxu0 0.0
    %750 = vmatprep.subr.mxu0 0.0
    %751 = vmatpush1.msra.mxu0 0.0
    %752 = vmatprep.subr.mxu0 0.0
    %753 = vmatpush1.msra.mxu0 0.0
    %754 = vmatprep.subr.mxu0 0.0
    %755 = vmatpush1.msra.mxu0 0.0
    %756 = vmatprep.subr.mxu0 0.0
    %757 = vmatpush1.msra.mxu0 0.0
    %758 = vmatprep.subr.mxu0 0.0
    %759 = vmatpush1.msra.mxu0 0.0
    %760 = vmatprep.subr.mxu0 0.0
    %761 = vmatpush1.msra.mxu0 0.0
    %762 = vmatprep.subr.mxu0 0.0
    %763 = vmatpush1.msra.mxu0 0.0
    %764 = vmatprep.subr.mxu0 0.0
    %765 = vmatpush1.msra.mxu0 0.0
    %766 = vmatprep.subr.mxu0 0.0
    %767 = vmatpush1.msra.mxu0 0.0
    %768 = vmatprep.subr.mxu0 0.0
    %769 = vmatpush1.msra.mxu0 0.0
    %770 = vmatprep.mubr.f32.mxu0 0.0
    %771 = vmatmul.mubr.f32.gmra.mrb[0].mxu0 %v704
    %v772 = vpop.f32.mrb[0].mxu0
    %v773 = vadd.f32 %v355, %v772
    %v774 = vpop.f32.mrb[0].mxu0
    %v775 = vadd.f32 %v359, %v774
    %776 = vdwg.mxu0
    %777 = vmatprep.subr.mxu0 0.0
    %778 = vmatpush1.msra.mxu0 %v304
    %779 = vmatprep.subr.mxu0 0.0
    %780 = vmatpush1.msra.mxu0 %v307
    %781 = vmatprep.subr.mxu0 0.0
    %782 = vmatpush1.msra.mxu0 %v310
    %783 = vmatprep.subr.mxu0 0.0
    %784 = vmatpush1.msra.mxu0 %v313
    %785 = vmatprep.subr.mxu0 0.0
    %786 = vmatpush1.msra.mxu0 %v316
    %787 = vmatprep.subr.mxu0 0.0
    %788 = vmatpush1.msra.mxu0 %v319
    %789 = vmatprep.subr.mxu0 0.0
    %790 = vmatpush1.msra.mxu0 %v322
    %791 = vmatprep.subr.mxu0 0.0
    %792 = vmatpush1.msra.mxu0 %v325
    %793 = vmatprep.subr.mxu0 0.0
    %794 = vmatpush1.msra.mxu0 %v328
    %795 = vmatprep.subr.mxu0 0.0
    %796 = vmatpush1.msra.mxu0 %v331
    %797 = vmatprep.subr.mxu0 0.0
    %798 = vmatpush1.msra.mxu0 %v334
    %799 = vmatprep.subr.mxu0 0.0
    %800 = vmatpush1.msra.mxu0 %v337
    %801 = vmatprep.subr.mxu0 0.0
    %802 = vmatpush1.msra.mxu0 %v340
    %803 = vmatprep.subr.mxu0 0.0
    %804 = vmatpush1.msra.mxu0 %v343
    %805 = vmatprep.subr.mxu0 0.0
    %806 = vmatpush1.msra.mxu0 %v346
    %807 = vmatprep.subr.mxu0 0.0
    %808 = vmatpush1.msra.mxu0 %v349
    %809 = vmatprep.subr.mxu0 0.0
    %810 = vmatpush1.msra.mxu0 0.0
    %811 = vmatprep.subr.mxu0 0.0
    %812 = vmatpush1.msra.mxu0 0.0
    %813 = vmatprep.subr.mxu0 0.0
    %814 = vmatpush1.msra.mxu0 0.0
    %815 = vmatprep.subr.mxu0 0.0
    %816 = vmatpush1.msra.mxu0 0.0
    %817 = vmatprep.subr.mxu0 0.0
    %818 = vmatpush1.msra.mxu0 0.0
    %819 = vmatprep.subr.mxu0 0.0
    %820 = vmatpush1.msra.mxu0 0.0
    %821 = vmatprep.subr.mxu0 0.0
    %822 = vmatpush1.msra.mxu0 0.0
    %823 = vmatprep.subr.mxu0 0.0
    %824 = vmatpush1.msra.mxu0 0.0
    %825 = vmatprep.subr.mxu0 0.0
    %826 = vmatpush1.msra.mxu0 0.0
    %827 = vmatprep.subr.mxu0 0.0
    %828 = vmatpush1.msra.mxu0 0.0
    %829 = vmatprep.subr.mxu0 0.0
    %830 = vmatpush1.msra.mxu0 0.0
    %831 = vmatprep.subr.mxu0 0.0
    %832 = vmatpush1.msra.mxu0 0.0
    %833 = vmatprep.subr.mxu0 0.0
    %834 = vmatpush1.msra.mxu0 0.0
    %835 = vmatprep.subr.mxu0 0.0
    %836 = vmatpush1.msra.mxu0 0.0
    %837 = vmatprep.subr.mxu0 0.0
    %838 = vmatpush1.msra.mxu0 0.0
    %839 = vmatprep.subr.mxu0 0.0
    %840 = vmatpush1.msra.mxu0 0.0
    %841 = vmatprep.mubr.f32.mxu0 0.0
    %842 = vmatmul.mubr.f32.gmra.mrb[0].mxu0 %v704
    %v843 = vpop.f32.mrb[0].mxu0
    %v844 = vadd.f32 %v363, %v843
    %v845 = vpop.f32.mrb[0].mxu0
    %846 = vdwg.mxu0
    %v848 = vrot.slane %v773, 6
    %v850 = vadd.f32 %v228, %v848
    %v851 = vxor.u32 %v850, 2147483648
    %v852 = vmul.f32 %v851, 1.442695
    %v853 = vpow.pop %v852
    %v854 = vadd.f32 %v853, 1.0
    %v855 = vrcp.pop %v854
    %v856 = vmul.f32 1.0, %v855
    %v858 = vrot.slane %v775, 6
    %v860 = vadd.f32 %v230, %v858
    %v861 = vxor.u32 %v860, 2147483648
    %v862 = vmul.f32 %v861, 1.442695
    %v863 = vpow.pop %v862
    %v864 = vadd.f32 %v863, 1.0
    %v865 = vrcp.pop %v864
    %v866 = vmul.f32 1.0, %v865
    %v868 = vrot.slane %v844, 6
    %v870 = vmul.f32 %v856, %v868
    %v871 = vadd.f32 %v299, %v870
    %v872 = vtanh.pop %v871
    %v873 = vsub.f32 1.0, %v866
    %v874 = vmul.f32 %v873, %v872
    %v875 = vrot.slane %v702, 7
    %v877 = vmul.f32 %v866, %v875
    %v878 = vadd.f32 %v874, %v877
    %v880 = vrot.slane %v878, 2
    %882 = vmatprep.subr.mxu0 %v303
    %883 = vmatpush1.msra.mxu0 %v302
    %884 = vmatprep.subr.mxu0 %v306
    %885 = vmatpush1.msra.mxu0 %v305
    %886 = vmatprep.subr.mxu0 %v309
    %887 = vmatpush1.msra.mxu0 %v308
    %888 = vmatprep.subr.mxu0 %v312
    %889 = vmatpush1.msra.mxu0 %v311
    %890 = vmatprep.subr.mxu0 %v315
    %891 = vmatpush1.msra.mxu0 %v314
    %892 = vmatprep.subr.mxu0 %v318
    %893 = vmatpush1.msra.mxu0 %v317
    %894 = vmatprep.subr.mxu0 %v321
    %895 = vmatpush1.msra.mxu0 %v320
    %896 = vmatprep.subr.mxu0 %v324
    %897 = vmatpush1.msra.mxu0 %v323
    %898 = vmatprep.subr.mxu0 %v327
    %899 = vmatpush1.msra.mxu0 %v326
    %900 = vmatprep.subr.mxu0 %v330
    %901 = vmatpush1.msra.mxu0 %v329
    %902 = vmatprep.subr.mxu0 %v333
    %903 = vmatpush1.msra.mxu0 %v332
    %904 = vmatprep.subr.mxu0 %v336
    %905 = vmatpush1.msra.mxu0 %v335
    %906 = vmatprep.subr.mxu0 %v339
    %907 = vmatpush1.msra.mxu0 %v338
    %908 = vmatprep.subr.mxu0 %v342
    %909 = vmatpush1.msra.mxu0 %v341
    %910 = vmatprep.subr.mxu0 %v345
    %911 = vmatpush1.msra.mxu0 %v344
    %912 = vmatprep.subr.mxu0 %v348
    %913 = vmatpush1.msra.mxu0 %v347
    %914 = vmatprep.subr.mxu0 0.0
    %915 = vmatpush1.msra.mxu0 0.0
    %916 = vmatprep.subr.mxu0 0.0
    %917 = vmatpush1.msra.mxu0 0.0
    %918 = vmatprep.subr.mxu0 0.0
    %919 = vmatpush1.msra.mxu0 0.0
    %920 = vmatprep.subr.mxu0 0.0
    %921 = vmatpush1.msra.mxu0 0.0
    %922 = vmatprep.subr.mxu0 0.0
    %923 = vmatpush1.msra.mxu0 0.0
    %924 = vmatprep.subr.mxu0 0.0
    %925 = vmatpush1.msra.mxu0 0.0
    %926 = vmatprep.subr.mxu0 0.0
    %927 = vmatpush1.msra.mxu0 0.0
    %928 = vmatprep.subr.mxu0 0.0
    %929 = vmatpush1.msra.mxu0 0.0
    %930 = vmatprep.subr.mxu0 0.0
    %931 = vmatpush1.msra.mxu0 0.0
    %932 = vmatprep.subr.mxu0 0.0
    %933 = vmatpush1.msra.mxu0 0.0
    %934 = vmatprep.subr.mxu0 0.0
    %935 = vmatpush1.msra.mxu0 0.0
    %936 = vmatprep.subr.mxu0 0.0
    %937 = vmatpush1.msra.mxu0 0.0
    %938 = vmatprep.subr.mxu0 0.0
    %939 = vmatpush1.msra.mxu0 0.0
    %940 = vmatprep.subr.mxu0 0.0
    %941 = vmatpush1.msra.mxu0 0.0
    %942 = vmatprep.subr.mxu0 0.0
    %943 = vmatpush1.msra.mxu0 0.0
    %944 = vmatprep.subr.mxu0 0.0
    %945 = vmatpush1.msra.mxu0 0.0
    %946 = vmatprep.mubr.f32.mxu0 0.0
    %947 = vmatmul.mubr.f32.gmra.mrb[0].mxu0 %v880
    %v948 = vpop.f32.mrb[0].mxu0
    %v949 = vadd.f32 %v355, %v948
    %v950 = vpop.f32.mrb[0].mxu0
    %v951 = vadd.f32 %v359, %v950
    %952 = vdwg.mxu0
    %953 = vmatprep.subr.mxu0 0.0
    %954 = vmatpush1.msra.mxu0 %v304
    %955 = vmatprep.subr.mxu0 0.0
    %956 = vmatpush1.msra.mxu0 %v307
    %957 = vmatprep.subr.mxu0 0.0
    %958 = vmatpush1.msra.mxu0 %v310
    %959 = vmatprep.subr.mxu0 0.0
    %960 = vmatpush1.msra.mxu0 %v313
    %961 = vmatprep.subr.mxu0 0.0
    %962 = vmatpush1.msra.mxu0 %v316
    %963 = vmatprep.subr.mxu0 0.0
    %964 = vmatpush1.msra.mxu0 %v319
    %965 = vmatprep.subr.mxu0 0.0
    %966 = vmatpush1.msra.mxu0 %v322
    %967 = vmatprep.subr.mxu0 0.0
    %968 = vmatpush1.msra.mxu0 %v325
    %969 = vmatprep.subr.mxu0 0.0
    %970 = vmatpush1.msra.mxu0 %v328
    %971 = vmatprep.subr.mxu0 0.0
    %972 = vmatpush1.msra.mxu0 %v331
    %973 = vmatprep.subr.mxu0 0.0
    %974 = vmatpush1.msra.mxu0 %v334
    %975 = vmatprep.subr.mxu0 0.0
    %976 = vmatpush1.msra.mxu0 %v337
    %977 = vmatprep.subr.mxu0 0.0
    %978 = vmatpush1.msra.mxu0 %v340
    %979 = vmatprep.subr.mxu0 0.0
    %980 = vmatpush1.msra.mxu0 %v343
    %981 = vmatprep.subr.mxu0 0.0
    %982 = vmatpush1.msra.mxu0 %v346
    %983 = vmatprep.subr.mxu0 0.0
    %984 = vmatpush1.msra.mxu0 %v349
    %985 = vmatprep.subr.mxu0 0.0
    %986 = vmatpush1.msra.mxu0 0.0
    %987 = vmatprep.subr.mxu0 0.0
    %988 = vmatpush1.msra.mxu0 0.0
    %989 = vmatprep.subr.mxu0 0.0
    %990 = vmatpush1.msra.mxu0 0.0
    %991 = vmatprep.subr.mxu0 0.0
    %992 = vmatpush1.msra.mxu0 0.0
    %993 = vmatprep.subr.mxu0 0.0
    %994 = vmatpush1.msra.mxu0 0.0
    %995 = vmatprep.subr.mxu0 0.0
    %996 = vmatpush1.msra.mxu0 0.0
    %997 = vmatprep.subr.mxu0 0.0
    %998 = vmatpush1.msra.mxu0 0.0
    %999 = vmatprep.subr.mxu0 0.0
    %1000 = vmatpush1.msra.mxu0 0.0
    %1001 = vmatprep.subr.mxu0 0.0
    %1002 = vmatpush1.msra.mxu0 0.0
    %1003 = vmatprep.subr.mxu0 0.0
    %1004 = vmatpush1.msra.mxu0 0.0
    %1005 = vmatprep.subr.mxu0 0.0
    %1006 = vmatpush1.msra.mxu0 0.0
    %1007 = vmatprep.subr.mxu0 0.0
    %1008 = vmatpush1.msra.mxu0 0.0
    %1009 = vmatprep.subr.mxu0 0.0
    %1010 = vmatpush1.msra.mxu0 0.0
    %1011 = vmatprep.subr.mxu0 0.0
    %1012 = vmatpush1.msra.mxu0 0.0
    %1013 = vmatprep.subr.mxu0 0.0
    %1014 = vmatpush1.msra.mxu0 0.0
    %1015 = vmatprep.subr.mxu0 0.0
    %1016 = vmatpush1.msra.mxu0 0.0
    %1017 = vmatprep.mubr.f32.mxu0 0.0
    %1018 = vmatmul.mubr.f32.gmra.mrb[0].mxu0 %v880
    %v1019 = vpop.f32.mrb[0].mxu0
    %v1020 = vadd.f32 %v363, %v1019
    %v1021 = vpop.f32.mrb[0].mxu0
    %1022 = vdwg.mxu0
    %v1024 = vrot.slane %v949, 5
    %v1026 = vadd.f32 %v228, %v1024
    %v1027 = vxor.u32 %v1026, 2147483648
    %v1028 = vmul.f32 %v1027, 1.442695
    %v1029 = vpow.pop %v1028
    %v1030 = vadd.f32 %v1029, 1.0
    %v1031 = vrcp.pop %v1030
    %v1032 = vmul.f32 1.0, %v1031
    %v1034 = vrot.slane %v951, 5
    %v1036 = vadd.f32 %v230, %v1034
    %v1037 = vxor.u32 %v1036, 2147483648
    %v1038 = vmul.f32 %v1037, 1.442695
    %v1039 = vpow.pop %v1038
    %v1040 = vadd.f32 %v1039, 1.0
    %v1041 = vrcp.pop %v1040
    %v1042 = vmul.f32 1.0, %v1041
    %v1044 = vrot.slane %v1020, 5
    %v1046 = vmul.f32 %v1032, %v1044
    %v1047 = vadd.f32 %v299, %v1046
    %v1048 = vtanh.pop %v1047
    %v1049 = vsub.f32 1.0, %v1042
    %v1050 = vmul.f32 %v1049, %v1048
    %v1051 = vrot.slane %v878, 7
    %v1053 = vmul.f32 %v1042, %v1051
    %v1054 = vadd.f32 %v1050, %v1053
    %v1056 = vrot.slane %v1054, 3
    %1058 = vmatprep.subr.mxu0 %v303
    %1059 = vmatpush1.msra.mxu0 %v302
    %1060 = vmatprep.subr.mxu0 %v306
    %1061 = vmatpush1.msra.mxu0 %v305
    %1062 = vmatprep.subr.mxu0 %v309
    %1063 = vmatpush1.msra.mxu0 %v308
    %1064 = vmatprep.subr.mxu0 %v312
    %1065 = vmatpush1.msra.mxu0 %v311
    %1066 = vmatprep.subr.mxu0 %v315
    %1067 = vmatpush1.msra.mxu0 %v314
    %1068 = vmatprep.subr.mxu0 %v318
    %1069 = vmatpush1.msra.mxu0 %v317
    %1070 = vmatprep.subr.mxu0 %v321
    %1071 = vmatpush1.msra.mxu0 %v320
    %1072 = vmatprep.subr.mxu0 %v324
    %1073 = vmatpush1.msra.mxu0 %v323
    %1074 = vmatprep.subr.mxu0 %v327
    %1075 = vmatpush1.msra.mxu0 %v326
    %1076 = vmatprep.subr.mxu0 %v330
    %1077 = vmatpush1.msra.mxu0 %v329
    %1078 = vmatprep.subr.mxu0 %v333
    %1079 = vmatpush1.msra.mxu0 %v332
    %1080 = vmatprep.subr.mxu0 %v336
    %1081 = vmatpush1.msra.mxu0 %v335
    %1082 = vmatprep.subr.mxu0 %v339
    %1083 = vmatpush1.msra.mxu0 %v338
    %1084 = vmatprep.subr.mxu0 %v342
    %1085 = vmatpush1.msra.mxu0 %v341
    %1086 = vmatprep.subr.mxu0 %v345
    %1087 = vmatpush1.msra.mxu0 %v344
    %1088 = vmatprep.subr.mxu0 %v348
    %1089 = vmatpush1.msra.mxu0 %v347
    %1090 = vmatprep.subr.mxu0 0.0
    %1091 = vmatpush1.msra.mxu0 0.0
    %1092 = vmatprep.subr.mxu0 0.0
    %1093 = vmatpush1.msra.mxu0 0.0
    %1094 = vmatprep.subr.mxu0 0.0
    %1095 = vmatpush1.msra.mxu0 0.0
    %1096 = vmatprep.subr.mxu0 0.0
    %1097 = vmatpush1.msra.mxu0 0.0
    %1098 = vmatprep.subr.mxu0 0.0
    %1099 = vmatpush1.msra.mxu0 0.0
    %1100 = vmatprep.subr.mxu0 0.0
    %1101 = vmatpush1.msra.mxu0 0.0
    %1102 = vmatprep.subr.mxu0 0.0
    %1103 = vmatpush1.msra.mxu0 0.0
    %1104 = vmatprep.subr.mxu0 0.0
    %1105 = vmatpush1.msra.mxu0 0.0
    %1106 = vmatprep.subr.mxu0 0.0
    %1107 = vmatpush1.msra.mxu0 0.0
    %1108 = vmatprep.subr.mxu0 0.0
    %1109 = vmatpush1.msra.mxu0 0.0
    %1110 = vmatprep.subr.mxu0 0.0
    %1111 = vmatpush1.msra.mxu0 0.0
    %1112 = vmatprep.subr.mxu0 0.0
    %1113 = vmatpush1.msra.mxu0 0.0
    %1114 = vmatprep.subr.mxu0 0.0
    %1115 = vmatpush1.msra.mxu0 0.0
    %1116 = vmatprep.subr.mxu0 0.0
    %1117 = vmatpush1.msra.mxu0 0.0
    %1118 = vmatprep.subr.mxu0 0.0
    %1119 = vmatpush1.msra.mxu0 0.0
    %1120 = vmatprep.subr.mxu0 0.0
    %1121 = vmatpush1.msra.mxu0 0.0
    %1122 = vmatprep.mubr.f32.mxu0 0.0
    %1123 = vmatmul.mubr.f32.gmra.mrb[0].mxu0 %v1056
    %v1124 = vpop.f32.mrb[0].mxu0
    %v1125 = vadd.f32 %v355, %v1124
    %v1126 = vpop.f32.mrb[0].mxu0
    %v1127 = vadd.f32 %v359, %v1126
    %1128 = vdwg.mxu0
    %1129 = vmatprep.subr.mxu0 0.0
    %1130 = vmatpush1.msra.mxu0 %v304
    %1131 = vmatprep.subr.mxu0 0.0
    %1132 = vmatpush1.msra.mxu0 %v307
    %1133 = vmatprep.subr.mxu0 0.0
    %1134 = vmatpush1.msra.mxu0 %v310
    %1135 = vmatprep.subr.mxu0 0.0
    %1136 = vmatpush1.msra.mxu0 %v313
    %1137 = vmatprep.subr.mxu0 0.0
    %1138 = vmatpush1.msra.mxu0 %v316
    %1139 = vmatprep.subr.mxu0 0.0
    %1140 = vmatpush1.msra.mxu0 %v319
    %1141 = vmatprep.subr.mxu0 0.0
    %1142 = vmatpush1.msra.mxu0 %v322
    %1143 = vmatprep.subr.mxu0 0.0
    %1144 = vmatpush1.msra.mxu0 %v325
    %1145 = vmatprep.subr.mxu0 0.0
    %1146 = vmatpush1.msra.mxu0 %v328
    %1147 = vmatprep.subr.mxu0 0.0
    %1148 = vmatpush1.msra.mxu0 %v331
    %1149 = vmatprep.subr.mxu0 0.0
    %1150 = vmatpush1.msra.mxu0 %v334
    %1151 = vmatprep.subr.mxu0 0.0
    %1152 = vmatpush1.msra.mxu0 %v337
    %1153 = vmatprep.subr.mxu0 0.0
    %1154 = vmatpush1.msra.mxu0 %v340
    %1155 = vmatprep.subr.mxu0 0.0
    %1156 = vmatpush1.msra.mxu0 %v343
    %1157 = vmatprep.subr.mxu0 0.0
    %1158 = vmatpush1.msra.mxu0 %v346
    %1159 = vmatprep.subr.mxu0 0.0
    %1160 = vmatpush1.msra.mxu0 %v349
    %1161 = vmatprep.subr.mxu0 0.0
    %1162 = vmatpush1.msra.mxu0 0.0
    %1163 = vmatprep.subr.mxu0 0.0
    %1164 = vmatpush1.msra.mxu0 0.0
    %1165 = vmatprep.subr.mxu0 0.0
    %1166 = vmatpush1.msra.mxu0 0.0
    %1167 = vmatprep.subr.mxu0 0.0
    %1168 = vmatpush1.msra.mxu0 0.0
    %1169 = vmatprep.subr.mxu0 0.0
    %1170 = vmatpush1.msra.mxu0 0.0
    %1171 = vmatprep.subr.mxu0 0.0
    %1172 = vmatpush1.msra.mxu0 0.0
    %1173 = vmatprep.subr.mxu0 0.0
    %1174 = vmatpush1.msra.mxu0 0.0
    %1175 = vmatprep.subr.mxu0 0.0
    %1176 = vmatpush1.msra.mxu0 0.0
    %1177 = vmatprep.subr.mxu0 0.0
    %1178 = vmatpush1.msra.mxu0 0.0
    %1179 = vmatprep.subr.mxu0 0.0
    %1180 = vmatpush1.msra.mxu0 0.0
    %1181 = vmatprep.subr.mxu0 0.0
    %1182 = vmatpush1.msra.mxu0 0.0
    %1183 = vmatprep.subr.mxu0 0.0
    %1184 = vmatpush1.msra.mxu0 0.0
    %1185 = vmatprep.subr.mxu0 0.0
    %1186 = vmatpush1.msra.mxu0 0.0
    %1187 = vmatprep.subr.mxu0 0.0
    %1188 = vmatpush1.msra.mxu0 0.0
    %1189 = vmatprep.subr.mxu0 0.0
    %1190 = vmatpush1.msra.mxu0 0.0
    %1191 = vmatprep.subr.mxu0 0.0
    %1192 = vmatpush1.msra.mxu0 0.0
    %1193 = vmatprep.mubr.f32.mxu0 0.0
    %1194 = vmatmul.mubr.f32.gmra.mrb[0].mxu0 %v1056
    %v1195 = vpop.f32.mrb[0].mxu0
    %v1196 = vadd.f32 %v363, %v1195
    %v1197 = vpop.f32.mrb[0].mxu0
    %1198 = vdwg.mxu0
    %v1200 = vrot.slane %v1125, 4
    %v1202 = vadd.f32 %v228, %v1200
    %v1203 = vxor.u32 %v1202, 2147483648
    %v1204 = vmul.f32 %v1203, 1.442695
    %v1205 = vpow.pop %v1204
    %v1206 = vadd.f32 %v1205, 1.0
    %v1207 = vrcp.pop %v1206
    %v1208 = vmul.f32 1.0, %v1207
    %v1210 = vrot.slane %v1127, 4
    %v1212 = vadd.f32 %v230, %v1210
    %v1213 = vxor.u32 %v1212, 2147483648
    %v1214 = vmul.f32 %v1213, 1.442695
    %v1215 = vpow.pop %v1214
    %v1216 = vadd.f32 %v1215, 1.0
    %v1217 = vrcp.pop %v1216
    %v1218 = vmul.f32 1.0, %v1217
    %v1220 = vrot.slane %v1196, 4
    %v1222 = vmul.f32 %v1208, %v1220
    %v1223 = vadd.f32 %v299, %v1222
    %v1224 = vtanh.pop %v1223
    %v1225 = vsub.f32 1.0, %v1218
    %v1226 = vmul.f32 %v1225, %v1224
    %v1227 = vrot.slane %v1054, 7
    %v1229 = vmul.f32 %v1218, %v1227
    %v1230 = vadd.f32 %v1226, %v1229
    %v1232 = vrot.slane %v1230, 4
    %1234 = vmatprep.subr.mxu0 %v303
    %1235 = vmatpush1.msra.mxu0 %v302
    %1236 = vmatprep.subr.mxu0 %v306
    %1237 = vmatpush1.msra.mxu0 %v305
    %1238 = vmatprep.subr.mxu0 %v309
    %1239 = vmatpush1.msra.mxu0 %v308
    %1240 = vmatprep.subr.mxu0 %v312
    %1241 = vmatpush1.msra.mxu0 %v311
    %1242 = vmatprep.subr.mxu0 %v315
    %1243 = vmatpush1.msra.mxu0 %v314
    %1244 = vmatprep.subr.mxu0 %v318
    %1245 = vmatpush1.msra.mxu0 %v317
    %1246 = vmatprep.subr.mxu0 %v321
    %1247 = vmatpush1.msra.mxu0 %v320
    %1248 = vmatprep.subr.mxu0 %v324
    %1249 = vmatpush1.msra.mxu0 %v323
    %1250 = vmatprep.subr.mxu0 %v327
    %1251 = vmatpush1.msra.mxu0 %v326
    %1252 = vmatprep.subr.mxu0 %v330
    %1253 = vmatpush1.msra.mxu0 %v329
    %1254 = vmatprep.subr.mxu0 %v333
    %1255 = vmatpush1.msra.mxu0 %v332
    %1256 = vmatprep.subr.mxu0 %v336
    %1257 = vmatpush1.msra.mxu0 %v335
    %1258 = vmatprep.subr.mxu0 %v339
    %1259 = vmatpush1.msra.mxu0 %v338
    %1260 = vmatprep.subr.mxu0 %v342
    %1261 = vmatpush1.msra.mxu0 %v341
    %1262 = vmatprep.subr.mxu0 %v345
    %1263 = vmatpush1.msra.mxu0 %v344
    %1264 = vmatprep.subr.mxu0 %v348
    %1265 = vmatpush1.msra.mxu0 %v347
    %1266 = vmatprep.subr.mxu0 0.0
    %1267 = vmatpush1.msra.mxu0 0.0
    %1268 = vmatprep.subr.mxu0 0.0
    %1269 = vmatpush1.msra.mxu0 0.0
    %1270 = vmatprep.subr.mxu0 0.0
    %1271 = vmatpush1.msra.mxu0 0.0
    %1272 = vmatprep.subr.mxu0 0.0
    %1273 = vmatpush1.msra.mxu0 0.0
    %1274 = vmatprep.subr.mxu0 0.0
    %1275 = vmatpush1.msra.mxu0 0.0
    %1276 = vmatprep.subr.mxu0 0.0
    %1277 = vmatpush1.msra.mxu0 0.0
    %1278 = vmatprep.subr.mxu0 0.0
    %1279 = vmatpush1.msra.mxu0 0.0
    %1280 = vmatprep.subr.mxu0 0.0
    %1281 = vmatpush1.msra.mxu0 0.0
    %1282 = vmatprep.subr.mxu0 0.0
    %1283 = vmatpush1.msra.mxu0 0.0
    %1284 = vmatprep.subr.mxu0 0.0
    %1285 = vmatpush1.msra.mxu0 0.0
    %1286 = vmatprep.subr.mxu0 0.0
    %1287 = vmatpush1.msra.mxu0 0.0
    %1288 = vmatprep.subr.mxu0 0.0
    %1289 = vmatpush1.msra.mxu0 0.0
    %1290 = vmatprep.subr.mxu0 0.0
    %1291 = vmatpush1.msra.mxu0 0.0
    %1292 = vmatprep.subr.mxu0 0.0
    %1293 = vmatpush1.msra.mxu0 0.0
    %1294 = vmatprep.subr.mxu0 0.0
    %1295 = vmatpush1.msra.mxu0 0.0
    %1296 = vmatprep.subr.mxu0 0.0
    %1297 = vmatpush1.msra.mxu0 0.0
    %1298 = vmatprep.mubr.f32.mxu0 0.0
    %1299 = vmatmul.mubr.f32.gmra.mrb[0].mxu0 %v1232
    %v1300 = vpop.f32.mrb[0].mxu0
    %v1301 = vadd.f32 %v355, %v1300
    %v1302 = vpop.f32.mrb[0].mxu0
    %v1303 = vadd.f32 %v359, %v1302
    %1304 = vdwg.mxu0
    %1305 = vmatprep.subr.mxu0 0.0
    %1306 = vmatpush1.msra.mxu0 %v304
    %1307 = vmatprep.subr.mxu0 0.0
    %1308 = vmatpush1.msra.mxu0 %v307
    %1309 = vmatprep.subr.mxu0 0.0
    %1310 = vmatpush1.msra.mxu0 %v310
    %1311 = vmatprep.subr.mxu0 0.0
    %1312 = vmatpush1.msra.mxu0 %v313
    %1313 = vmatprep.subr.mxu0 0.0
    %1314 = vmatpush1.msra.mxu0 %v316
    %1315 = vmatprep.subr.mxu0 0.0
    %1316 = vmatpush1.msra.mxu0 %v319
    %1317 = vmatprep.subr.mxu0 0.0
    %1318 = vmatpush1.msra.mxu0 %v322
    %1319 = vmatprep.subr.mxu0 0.0
    %1320 = vmatpush1.msra.mxu0 %v325
    %1321 = vmatprep.subr.mxu0 0.0
    %1322 = vmatpush1.msra.mxu0 %v328
    %1323 = vmatprep.subr.mxu0 0.0
    %1324 = vmatpush1.msra.mxu0 %v331
    %1325 = vmatprep.subr.mxu0 0.0
    %1326 = vmatpush1.msra.mxu0 %v334
    %1327 = vmatprep.subr.mxu0 0.0
    %1328 = vmatpush1.msra.mxu0 %v337
    %1329 = vmatprep.subr.mxu0 0.0
    %1330 = vmatpush1.msra.mxu0 %v340
    %1331 = vmatprep.subr.mxu0 0.0
    %1332 = vmatpush1.msra.mxu0 %v343
    %1333 = vmatprep.subr.mxu0 0.0
    %1334 = vmatpush1.msra.mxu0 %v346
    %1335 = vmatprep.subr.mxu0 0.0
    %1336 = vmatpush1.msra.mxu0 %v349
    %1337 = vmatprep.subr.mxu0 0.0
    %1338 = vmatpush1.msra.mxu0 0.0
    %1339 = vmatprep.subr.mxu0 0.0
    %1340 = vmatpush1.msra.mxu0 0.0
    %1341 = vmatprep.subr.mxu0 0.0
    %1342 = vmatpush1.msra.mxu0 0.0
    %1343 = vmatprep.subr.mxu0 0.0
    %1344 = vmatpush1.msra.mxu0 0.0
    %1345 = vmatprep.subr.mxu0 0.0
    %1346 = vmatpush1.msra.mxu0 0.0
    %1347 = vmatprep.subr.mxu0 0.0
    %1348 = vmatpush1.msra.mxu0 0.0
    %1349 = vmatprep.subr.mxu0 0.0
    %1350 = vmatpush1.msra.mxu0 0.0
    %1351 = vmatprep.subr.mxu0 0.0
    %1352 = vmatpush1.msra.mxu0 0.0
    %1353 = vmatprep.subr.mxu0 0.0
    %1354 = vmatpush1.msra.mxu0 0.0
    %1355 = vmatprep.subr.mxu0 0.0
    %1356 = vmatpush1.msra.mxu0 0.0
    %1357 = vmatprep.subr.mxu0 0.0
    %1358 = vmatpush1.msra.mxu0 0.0
    %1359 = vmatprep.subr.mxu0 0.0
    %1360 = vmatpush1.msra.mxu0 0.0
    %1361 = vmatprep.subr.mxu0 0.0
    %1362 = vmatpush1.msra.mxu0 0.0
    %1363 = vmatprep.subr.mxu0 0.0
    %1364 = vmatpush1.msra.mxu0 0.0
    %1365 = vmatprep.subr.mxu0 0.0
    %1366 = vmatpush1.msra.mxu0 0.0
    %1367 = vmatprep.subr.mxu0 0.0
    %1368 = vmatpush1.msra.mxu0 0.0
    %1369 = vmatprep.mubr.f32.mxu0 0.0
    %1370 = vmatmul.mubr.f32.gmra.mrb[0].mxu0 %v1232
    %v1371 = vpop.f32.mrb[0].mxu0
    %v1372 = vadd.f32 %v363, %v1371
    %v1373 = vpop.f32.mrb[0].mxu0
    %1374 = vdwg.mxu0
    %v1376 = vrot.slane %v1301, 3
    %v1378 = vadd.f32 %v228, %v1376
    %v1379 = vxor.u32 %v1378, 2147483648
    %v1380 = vmul.f32 %v1379, 1.442695
    %v1381 = vpow.pop %v1380
    %v1382 = vadd.f32 %v1381, 1.0
    %v1383 = vrcp.pop %v1382
    %v1384 = vmul.f32 1.0, %v1383
    %v1386 = vrot.slane %v1303, 3
    %v1388 = vadd.f32 %v230, %v1386
    %v1389 = vxor.u32 %v1388, 2147483648
    %v1390 = vmul.f32 %v1389, 1.442695
    %v1391 = vpow.pop %v1390
    %v1392 = vadd.f32 %v1391, 1.0
    %v1393 = vrcp.pop %v1392
    %v1394 = vmul.f32 1.0, %v1393
    %v1396 = vrot.slane %v1372, 3
    %v1398 = vmul.f32 %v1384, %v1396
    %v1399 = vadd.f32 %v299, %v1398
    %v1400 = vtanh.pop %v1399
    %v1401 = vsub.f32 1.0, %v1394
    %v1402 = vmul.f32 %v1401, %v1400
    %v1403 = vrot.slane %v1230, 7
    %v1405 = vmul.f32 %v1394, %v1403
    %v1406 = vadd.f32 %v1402, %v1405
    %v1408 = vrot.slane %v1406, 5
    %1410 = vmatprep.subr.mxu0 %v303
    %1411 = vmatpush1.msra.mxu0 %v302
    %1412 = vmatprep.subr.mxu0 %v306
    %1413 = vmatpush1.msra.mxu0 %v305
    %1414 = vmatprep.subr.mxu0 %v309
    %1415 = vmatpush1.msra.mxu0 %v308
    %1416 = vmatprep.subr.mxu0 %v312
    %1417 = vmatpush1.msra.mxu0 %v311
    %1418 = vmatprep.subr.mxu0 %v315
    %1419 = vmatpush1.msra.mxu0 %v314
    %1420 = vmatprep.subr.mxu0 %v318
    %1421 = vmatpush1.msra.mxu0 %v317
    %1422 = vmatprep.subr.mxu0 %v321
    %1423 = vmatpush1.msra.mxu0 %v320
    %1424 = vmatprep.subr.mxu0 %v324
    %1425 = vmatpush1.msra.mxu0 %v323
    %1426 = vmatprep.subr.mxu0 %v327
    %1427 = vmatpush1.msra.mxu0 %v326
    %1428 = vmatprep.subr.mxu0 %v330
    %1429 = vmatpush1.msra.mxu0 %v329
    %1430 = vmatprep.subr.mxu0 %v333
    %1431 = vmatpush1.msra.mxu0 %v332
    %1432 = vmatprep.subr.mxu0 %v336
    %1433 = vmatpush1.msra.mxu0 %v335
    %1434 = vmatprep.subr.mxu0 %v339
    %1435 = vmatpush1.msra.mxu0 %v338
    %1436 = vmatprep.subr.mxu0 %v342
    %1437 = vmatpush1.msra.mxu0 %v341
    %1438 = vmatprep.subr.mxu0 %v345
    %1439 = vmatpush1.msra.mxu0 %v344
    %1440 = vmatprep.subr.mxu0 %v348
    %1441 = vmatpush1.msra.mxu0 %v347
    %1442 = vmatprep.subr.mxu0 0.0
    %1443 = vmatpush1.msra.mxu0 0.0
    %1444 = vmatprep.subr.mxu0 0.0
    %1445 = vmatpush1.msra.mxu0 0.0
    %1446 = vmatprep.subr.mxu0 0.0
    %1447 = vmatpush1.msra.mxu0 0.0
    %1448 = vmatprep.subr.mxu0 0.0
    %1449 = vmatpush1.msra.mxu0 0.0
    %1450 = vmatprep.subr.mxu0 0.0
    %1451 = vmatpush1.msra.mxu0 0.0
    %1452 = vmatprep.subr.mxu0 0.0
    %1453 = vmatpush1.msra.mxu0 0.0
    %1454 = vmatprep.subr.mxu0 0.0
    %1455 = vmatpush1.msra.mxu0 0.0
    %1456 = vmatprep.subr.mxu0 0.0
    %1457 = vmatpush1.msra.mxu0 0.0
    %1458 = vmatprep.subr.mxu0 0.0
    %1459 = vmatpush1.msra.mxu0 0.0
    %1460 = vmatprep.subr.mxu0 0.0
    %1461 = vmatpush1.msra.mxu0 0.0
    %1462 = vmatprep.subr.mxu0 0.0
    %1463 = vmatpush1.msra.mxu0 0.0
    %1464 = vmatprep.subr.mxu0 0.0
    %1465 = vmatpush1.msra.mxu0 0.0
    %1466 = vmatprep.subr.mxu0 0.0
    %1467 = vmatpush1.msra.mxu0 0.0
    %1468 = vmatprep.subr.mxu0 0.0
    %1469 = vmatpush1.msra.mxu0 0.0
    %1470 = vmatprep.subr.mxu0 0.0
    %1471 = vmatpush1.msra.mxu0 0.0
    %1472 = vmatprep.subr.mxu0 0.0
    %1473 = vmatpush1.msra.mxu0 0.0
    %1474 = vmatprep.mubr.f32.mxu0 0.0
    %1475 = vmatmul.mubr.f32.gmra.mrb[0].mxu0 %v1408
    %v1476 = vpop.f32.mrb[0].mxu0
    %v1477 = vadd.f32 %v355, %v1476
    %v1478 = vpop.f32.mrb[0].mxu0
    %v1479 = vadd.f32 %v359, %v1478
    %1480 = vdwg.mxu0
    %1481 = vmatprep.subr.mxu0 0.0
    %1482 = vmatpush1.msra.mxu0 %v304
    %1483 = vmatprep.subr.mxu0 0.0
    %1484 = vmatpush1.msra.mxu0 %v307
    %1485 = vmatprep.subr.mxu0 0.0
    %1486 = vmatpush1.msra.mxu0 %v310
    %1487 = vmatprep.subr.mxu0 0.0
    %1488 = vmatpush1.msra.mxu0 %v313
    %1489 = vmatprep.subr.mxu0 0.0
    %1490 = vmatpush1.msra.mxu0 %v316
    %1491 = vmatprep.subr.mxu0 0.0
    %1492 = vmatpush1.msra.mxu0 %v319
    %1493 = vmatprep.subr.mxu0 0.0
    %1494 = vmatpush1.msra.mxu0 %v322
    %1495 = vmatprep.subr.mxu0 0.0
    %1496 = vmatpush1.msra.mxu0 %v325
    %1497 = vmatprep.subr.mxu0 0.0
    %1498 = vmatpush1.msra.mxu0 %v328
    %1499 = vmatprep.subr.mxu0 0.0
    %1500 = vmatpush1.msra.mxu0 %v331
    %1501 = vmatprep.subr.mxu0 0.0
    %1502 = vmatpush1.msra.mxu0 %v334
    %1503 = vmatprep.subr.mxu0 0.0
    %1504 = vmatpush1.msra.mxu0 %v337
    %1505 = vmatprep.subr.mxu0 0.0
    %1506 = vmatpush1.msra.mxu0 %v340
    %1507 = vmatprep.subr.mxu0 0.0
    %1508 = vmatpush1.msra.mxu0 %v343
    %1509 = vmatprep.subr.mxu0 0.0
    %1510 = vmatpush1.msra.mxu0 %v346
    %1511 = vmatprep.subr.mxu0 0.0
    %1512 = vmatpush1.msra.mxu0 %v349
    %1513 = vmatprep.subr.mxu0 0.0
    %1514 = vmatpush1.msra.mxu0 0.0
    %1515 = vmatprep.subr.mxu0 0.0
    %1516 = vmatpush1.msra.mxu0 0.0
    %1517 = vmatprep.subr.mxu0 0.0
    %1518 = vmatpush1.msra.mxu0 0.0
    %1519 = vmatprep.subr.mxu0 0.0
    %1520 = vmatpush1.msra.mxu0 0.0
    %1521 = vmatprep.subr.mxu0 0.0
    %1522 = vmatpush1.msra.mxu0 0.0
    %1523 = vmatprep.subr.mxu0 0.0
    %1524 = vmatpush1.msra.mxu0 0.0
    %1525 = vmatprep.subr.mxu0 0.0
    %1526 = vmatpush1.msra.mxu0 0.0
    %1527 = vmatprep.subr.mxu0 0.0
    %1528 = vmatpush1.msra.mxu0 0.0
    %1529 = vmatprep.subr.mxu0 0.0
    %1530 = vmatpush1.msra.mxu0 0.0
    %1531 = vmatprep.subr.mxu0 0.0
    %1532 = vmatpush1.msra.mxu0 0.0
    %1533 = vmatprep.subr.mxu0 0.0
    %1534 = vmatpush1.msra.mxu0 0.0
    %1535 = vmatprep.subr.mxu0 0.0
    %1536 = vmatpush1.msra.mxu0 0.0
    %1537 = vmatprep.subr.mxu0 0.0
    %1538 = vmatpush1.msra.mxu0 0.0
    %1539 = vmatprep.subr.mxu0 0.0
    %1540 = vmatpush1.msra.mxu0 0.0
    %1541 = vmatprep.subr.mxu0 0.0
    %1542 = vmatpush1.msra.mxu0 0.0
    %1543 = vmatprep.subr.mxu0 0.0
    %1544 = vmatpush1.msra.mxu0 0.0
    %1545 = vmatprep.mubr.f32.mxu0 0.0
    %1546 = vmatmul.mubr.f32.gmra.mrb[0].mxu0 %v1408
    %v1547 = vpop.f32.mrb[0].mxu0
    %v1548 = vadd.f32 %v363, %v1547
    %v1549 = vpop.f32.mrb[0].mxu0
    %1550 = vdwg.mxu0
    %v1552 = vrot.slane %v1477, 2
    %v1554 = vadd.f32 %v228, %v1552
    %v1555 = vxor.u32 %v1554, 2147483648
    %v1556 = vmul.f32 %v1555, 1.442695
    %v1557 = vpow.pop %v1556
    %v1558 = vadd.f32 %v1557, 1.0
    %v1559 = vrcp.pop %v1558
    %v1560 = vmul.f32 1.0, %v1559
    %v1562 = vrot.slane %v1479, 2
    %v1564 = vadd.f32 %v230, %v1562
    %v1565 = vxor.u32 %v1564, 2147483648
    %v1566 = vmul.f32 %v1565, 1.442695
    %v1567 = vpow.pop %v1566
    %v1568 = vadd.f32 %v1567, 1.0
    %v1569 = vrcp.pop %v1568
    %v1570 = vmul.f32 1.0, %v1569
    %v1572 = vrot.slane %v1548, 2
    %v1574 = vmul.f32 %v1560, %v1572
    %v1575 = vadd.f32 %v299, %v1574
    %v1576 = vtanh.pop %v1575
    %v1577 = vsub.f32 1.0, %v1570
    %v1578 = vmul.f32 %v1577, %v1576
    %v1579 = vrot.slane %v1406, 7
    %v1581 = vmul.f32 %v1570, %v1579
    %v1582 = vadd.f32 %v1578, %v1581
    %v1584 = vrot.slane %v1582, 6
    %1586 = vmatprep.subr.mxu0 %v303
    %1587 = vmatpush1.msra.mxu0 %v302
    %1588 = vmatprep.subr.mxu0 %v306
    %1589 = vmatpush1.msra.mxu0 %v305
    %1590 = vmatprep.subr.mxu0 %v309
    %1591 = vmatpush1.msra.mxu0 %v308
    %1592 = vmatprep.subr.mxu0 %v312
    %1593 = vmatpush1.msra.mxu0 %v311
    %1594 = vmatprep.subr.mxu0 %v315
    %1595 = vmatpush1.msra.mxu0 %v314
    %1596 = vmatprep.subr.mxu0 %v318
    %1597 = vmatpush1.msra.mxu0 %v317
    %1598 = vmatprep.subr.mxu0 %v321
    %1599 = vmatpush1.msra.mxu0 %v320
    %1600 = vmatprep.subr.mxu0 %v324
    %1601 = vmatpush1.msra.mxu0 %v323
    %1602 = vmatprep.subr.mxu0 %v327
    %1603 = vmatpush1.msra.mxu0 %v326
    %1604 = vmatprep.subr.mxu0 %v330
    %1605 = vmatpush1.msra.mxu0 %v329
    %1606 = vmatprep.subr.mxu0 %v333
    %1607 = vmatpush1.msra.mxu0 %v332
    %1608 = vmatprep.subr.mxu0 %v336
    %1609 = vmatpush1.msra.mxu0 %v335
    %1610 = vmatprep.subr.mxu0 %v339
    %1611 = vmatpush1.msra.mxu0 %v338
    %1612 = vmatprep.subr.mxu0 %v342
    %1613 = vmatpush1.msra.mxu0 %v341
    %1614 = vmatprep.subr.mxu0 %v345
    %1615 = vmatpush1.msra.mxu0 %v344
    %1616 = vmatprep.subr.mxu0 %v348
    %1617 = vmatpush1.msra.mxu0 %v347
    %1618 = vmatprep.subr.mxu0 0.0
    %1619 = vmatpush1.msra.mxu0 0.0
    %1620 = vmatprep.subr.mxu0 0.0
    %1621 = vmatpush1.msra.mxu0 0.0
    %1622 = vmatprep.subr.mxu0 0.0
    %1623 = vmatpush1.msra.mxu0 0.0
    %1624 = vmatprep.subr.mxu0 0.0
    %1625 = vmatpush1.msra.mxu0 0.0
    %1626 = vmatprep.subr.mxu0 0.0
    %1627 = vmatpush1.msra.mxu0 0.0
    %1628 = vmatprep.subr.mxu0 0.0
    %1629 = vmatpush1.msra.mxu0 0.0
    %1630 = vmatprep.subr.mxu0 0.0
    %1631 = vmatpush1.msra.mxu0 0.0
    %1632 = vmatprep.subr.mxu0 0.0
    %1633 = vmatpush1.msra.mxu0 0.0
    %1634 = vmatprep.subr.mxu0 0.0
    %1635 = vmatpush1.msra.mxu0 0.0
    %1636 = vmatprep.subr.mxu0 0.0
    %1637 = vmatpush1.msra.mxu0 0.0
    %1638 = vmatprep.subr.mxu0 0.0
    %1639 = vmatpush1.msra.mxu0 0.0
    %1640 = vmatprep.subr.mxu0 0.0
    %1641 = vmatpush1.msra.mxu0 0.0
    %1642 = vmatprep.subr.mxu0 0.0
    %1643 = vmatpush1.msra.mxu0 0.0
    %1644 = vmatprep.subr.mxu0 0.0
    %1645 = vmatpush1.msra.mxu0 0.0
    %1646 = vmatprep.subr.mxu0 0.0
    %1647 = vmatpush1.msra.mxu0 0.0
    %1648 = vmatprep.subr.mxu0 0.0
    %1649 = vmatpush1.msra.mxu0 0.0
    %1650 = vmatprep.mubr.f32.mxu0 0.0
    %1651 = vmatmul.mubr.f32.gmra.mrb[0].mxu0 %v1584
    %v1652 = vpop.f32.mrb[0].mxu0
    %v1653 = vadd.f32 %v355, %v1652
    %v1654 = vpop.f32.mrb[0].mxu0
    %v1655 = vadd.f32 %v359, %v1654
    %1656 = vdwg.mxu0
    %1657 = vmatprep.subr.mxu0 0.0
    %1658 = vmatpush1.msra.mxu0 %v304
    %1659 = vmatprep.subr.mxu0 0.0
    %1660 = vmatpush1.msra.mxu0 %v307
    %1661 = vmatprep.subr.mxu0 0.0
    %1662 = vmatpush1.msra.mxu0 %v310
    %1663 = vmatprep.subr.mxu0 0.0
    %1664 = vmatpush1.msra.mxu0 %v313
    %1665 = vmatprep.subr.mxu0 0.0
    %1666 = vmatpush1.msra.mxu0 %v316
    %1667 = vmatprep.subr.mxu0 0.0
    %1668 = vmatpush1.msra.mxu0 %v319
    %1669 = vmatprep.subr.mxu0 0.0
    %1670 = vmatpush1.msra.mxu0 %v322
    %1671 = vmatprep.subr.mxu0 0.0
    %1672 = vmatpush1.msra.mxu0 %v325
    %1673 = vmatprep.subr.mxu0 0.0
    %1674 = vmatpush1.msra.mxu0 %v328
    %1675 = vmatprep.subr.mxu0 0.0
    %1676 = vmatpush1.msra.mxu0 %v331
    %1677 = vmatprep.subr.mxu0 0.0
    %1678 = vmatpush1.msra.mxu0 %v334
    %1679 = vmatprep.subr.mxu0 0.0
    %1680 = vmatpush1.msra.mxu0 %v337
    %1681 = vmatprep.subr.mxu0 0.0
    %1682 = vmatpush1.msra.mxu0 %v340
    %1683 = vmatprep.subr.mxu0 0.0
    %1684 = vmatpush1.msra.mxu0 %v343
    %1685 = vmatprep.subr.mxu0 0.0
    %1686 = vmatpush1.msra.mxu0 %v346
    %1687 = vmatprep.subr.mxu0 0.0
    %1688 = vmatpush1.msra.mxu0 %v349
    %1689 = vmatprep.subr.mxu0 0.0
    %1690 = vmatpush1.msra.mxu0 0.0
    %1691 = vmatprep.subr.mxu0 0.0
    %1692 = vmatpush1.msra.mxu0 0.0
    %1693 = vmatprep.subr.mxu0 0.0
    %1694 = vmatpush1.msra.mxu0 0.0
    %1695 = vmatprep.subr.mxu0 0.0
    %1696 = vmatpush1.msra.mxu0 0.0
    %1697 = vmatprep.subr.mxu0 0.0
    %1698 = vmatpush1.msra.mxu0 0.0
    %1699 = vmatprep.subr.mxu0 0.0
    %1700 = vmatpush1.msra.mxu0 0.0
    %1701 = vmatprep.subr.mxu0 0.0
    %1702 = vmatpush1.msra.mxu0 0.0
    %1703 = vmatprep.subr.mxu0 0.0
    %1704 = vmatpush1.msra.mxu0 0.0
    %1705 = vmatprep.subr.mxu0 0.0
    %1706 = vmatpush1.msra.mxu0 0.0
    %1707 = vmatprep.subr.mxu0 0.0
    %1708 = vmatpush1.msra.mxu0 0.0
    %1709 = vmatprep.subr.mxu0 0.0
    %1710 = vmatpush1.msra.mxu0 0.0
    %1711 = vmatprep.subr.mxu0 0.0
    %1712 = vmatpush1.msra.mxu0 0.0
    %1713 = vmatprep.subr.mxu0 0.0
    %1714 = vmatpush1.msra.mxu0 0.0
    %1715 = vmatprep.subr.mxu0 0.0
    %1716 = vmatpush1.msra.mxu0 0.0
    %1717 = vmatprep.subr.mxu0 0.0
    %1718 = vmatpush1.msra.mxu0 0.0
    %1719 = vmatprep.subr.mxu0 0.0
    %1720 = vmatpush1.msra.mxu0 0.0
    %1721 = vmatprep.mubr.f32.mxu0 0.0
    %1722 = vmatmul.mubr.f32.gmra.mrb[0].mxu0 %v1584
    %v1723 = vpop.f32.mrb[0].mxu0
    %v1724 = vadd.f32 %v363, %v1723
    %v1725 = vpop.f32.mrb[0].mxu0
    %1726 = vdwg.mxu0
    %v1728 = vrot.slane %v1653, 1
    %v1730 = vadd.f32 %v228, %v1728
    %v1731 = vxor.u32 %v1730, 2147483648
    %v1732 = vmul.f32 %v1731, 1.442695
    %v1733 = vpow.pop %v1732
    %v1734 = vadd.f32 %v1733, 1.0
    %v1735 = vrcp.pop %v1734
    %v1736 = vmul.f32 1.0, %v1735
    %v1738 = vrot.slane %v1655, 1
    %v1740 = vadd.f32 %v230, %v1738
    %v1741 = vxor.u32 %v1740, 2147483648
    %v1742 = vmul.f32 %v1741, 1.442695
    %v1743 = vpow.pop %v1742
    %v1744 = vadd.f32 %v1743, 1.0
    %v1745 = vrcp.pop %v1744
    %v1746 = vmul.f32 1.0, %v1745
    %v1748 = vrot.slane %v1724, 1
    %v1750 = vmul.f32 %v1736, %v1748
    %v1751 = vadd.f32 %v299, %v1750
    %v1752 = vtanh.pop %v1751
    %v1753 = vsub.f32 1.0, %v1746
    %v1754 = vmul.f32 %v1753, %v1752
    %v1755 = vrot.slane %v1582, 7
    %v1757 = vmul.f32 %v1746, %v1755
    %v1758 = vadd.f32 %v1754, %v1757
    %vm1759 = vcmask 1040384
    %v1760 = vsel %vm1759, %v528, %v702
    %vm1761 = vcmask 1041408
    %v1762 = vsel %vm1761, %v1760, %v878
    %vm1763 = vcmask 1042432
    %v1764 = vsel %vm1763, %v1762, %v1054
    %v1765 = vsel %vm60, %v1764, %v1230
    %vm1766 = vcmask 1044480
    %v1767 = vsel %vm1766, %v1765, %v1406
    %vm1768 = vcmask 1045504
    %v1769 = vsel %vm1768, %v1767, %v1582
    %vm1770 = vcmask 1046528
    %v1771 = vsel %vm1770, %v1769, %v1758
    %v1772 = vld [vmem:[%s6] sm:$0xff]
    %v1773 = vld [vmem:[%s6 + $0x8] sm:$0xff]
    %v1774 = vld [vmem:[%s6 + $0x10] sm:$0xff]
    %v1775 = vld [vmem:[%s6 + $0x18] sm:$0xff]
    %v1776 = vld [vmem:[%s6 + $0x20] sm:$0xff]
    %v1777 = vld [vmem:[%s6 + $0x28] sm:$0xff]
    %v1778 = vld [vmem:[%s6 + $0x30] sm:$0xff]
    %v1779 = vld [vmem:[%s6 + $0x38] sm:$0xff]
    %v1780 = vld [vmem:[%s6 + $0x40] sm:$0xff]
    %v1781 = vld [vmem:[%s6 + $0x48] sm:$0xff]
    %v1782 = vld [vmem:[%s6 + $0x50] sm:$0xff]
    %v1783 = vld [vmem:[%s6 + $0x58] sm:$0xff]
    %v1784 = vld [vmem:[%s6 + $0x60] sm:$0xff]
    %v1785 = vld [vmem:[%s6 + $0x68] sm:$0xff]
    %v1786 = vld [vmem:[%s6 + $0x70] sm:$0xff]
    %v1787 = vld [vmem:[%s6 + $0x78] sm:$0xff]
    %v1788 = vld [vmem:[%s7] sm:$0x1]
    %v1790 = vlaneseq
    %v1791 = vshrl.u32 %v1790, 7
    %v1792 = vsub.s32 0, %v1791
    %v1793 = vrot.slane %v1788, %v1792
    %1795 = vmatprep.subr.mxu0 0.0
    %1796 = vmatpush1.msra.mxu0 %v1772
    %1797 = vmatprep.subr.mxu0 0.0
    %1798 = vmatpush1.msra.mxu0 %v1773
    %1799 = vmatprep.subr.mxu0 0.0
    %1800 = vmatpush1.msra.mxu0 %v1774
    %1801 = vmatprep.subr.mxu0 0.0
    %1802 = vmatpush1.msra.mxu0 %v1775
    %1803 = vmatprep.subr.mxu0 0.0
    %1804 = vmatpush1.msra.mxu0 %v1776
    %1805 = vmatprep.subr.mxu0 0.0
    %1806 = vmatpush1.msra.mxu0 %v1777
    %1807 = vmatprep.subr.mxu0 0.0
    %1808 = vmatpush1.msra.mxu0 %v1778
    %1809 = vmatprep.subr.mxu0 0.0
    %1810 = vmatpush1.msra.mxu0 %v1779
    %1811 = vmatprep.subr.mxu0 0.0
    %1812 = vmatpush1.msra.mxu0 %v1780
    %1813 = vmatprep.subr.mxu0 0.0
    %1814 = vmatpush1.msra.mxu0 %v1781
    %1815 = vmatprep.subr.mxu0 0.0
    %1816 = vmatpush1.msra.mxu0 %v1782
    %1817 = vmatprep.subr.mxu0 0.0
    %1818 = vmatpush1.msra.mxu0 %v1783
    %1819 = vmatprep.subr.mxu0 0.0
    %1820 = vmatpush1.msra.mxu0 %v1784
    %1821 = vmatprep.subr.mxu0 0.0
    %1822 = vmatpush1.msra.mxu0 %v1785
    %1823 = vmatprep.subr.mxu0 0.0
    %1824 = vmatpush1.msra.mxu0 %v1786
    %1825 = vmatprep.subr.mxu0 0.0
    %1826 = vmatpush1.msra.mxu0 %v1787
    %1827 = vmatprep.subr.mxu0 0.0
    %1828 = vmatpush1.msra.mxu0 0.0
    %1829 = vmatprep.subr.mxu0 0.0
    %1830 = vmatpush1.msra.mxu0 0.0
    %1831 = vmatprep.subr.mxu0 0.0
    %1832 = vmatpush1.msra.mxu0 0.0
    %1833 = vmatprep.subr.mxu0 0.0
    %1834 = vmatpush1.msra.mxu0 0.0
    %1835 = vmatprep.subr.mxu0 0.0
    %1836 = vmatpush1.msra.mxu0 0.0
    %1837 = vmatprep.subr.mxu0 0.0
    %1838 = vmatpush1.msra.mxu0 0.0
    %1839 = vmatprep.subr.mxu0 0.0
    %1840 = vmatpush1.msra.mxu0 0.0
    %1841 = vmatprep.subr.mxu0 0.0
    %1842 = vmatpush1.msra.mxu0 0.0
    %1843 = vmatprep.subr.mxu0 0.0
    %1844 = vmatpush1.msra.mxu0 0.0
    %1845 = vmatprep.subr.mxu0 0.0
    %1846 = vmatpush1.msra.mxu0 0.0
    %1847 = vmatprep.subr.mxu0 0.0
    %1848 = vmatpush1.msra.mxu0 0.0
    %1849 = vmatprep.subr.mxu0 0.0
    %1850 = vmatpush1.msra.mxu0 0.0
    %1851 = vmatprep.subr.mxu0 0.0
    %1852 = vmatpush1.msra.mxu0 0.0
    %1853 = vmatprep.subr.mxu0 0.0
    %1854 = vmatpush1.msra.mxu0 0.0
    %1855 = vmatprep.subr.mxu0 0.0
    %1856 = vmatpush1.msra.mxu0 0.0
    %1857 = vmatprep.subr.mxu0 0.0
    %1858 = vmatpush1.msra.mxu0 0.0
    %1859 = vmatprep.mubr.f32.mxu0 0.0
    %1860 = vmatmul.mubr.f32.gmra.mrb[0].mxu0 %v1771
    %v1861 = vpop.f32.mrb[0].mxu0
    %v1862 = vadd.f32 %v1793, %v1861
    %v1863 = vpop.f32.mrb[0].mxu0
    %1864 = vdwg.mxu0
    %vm1865 = vcmask 64512
    %v1866 = vsel %vm1865, %v1862, -inf
    %1867 = vmax.xlane.f32.xlu0 %v1866
    %v1868 = vpop.xlane.xlu0 %1867
    %v1869 = vsub.f32 %v1862, %v1868
    %v1870 = vmul.f32 %v1869, 1.442695
    %v1871 = vpow.pop %v1870
    %v1872 = vsel %vm1865, %v1871, 0.0
    %1873 = vadd.xlane.f32.xlu0 %v1872
    %v1874 = vpop.xlane.xlu0 %1873
    %v1875 = vlog2.pop %v1874
    %v1876 = vmul.f32 %v1875, 0.6931472
    %v1877 = vsub.f32 %v1869, %v1876
    %1878 = vst.msk [vmem:[#allocation5] sm:$0xff] %vm1865, %v1877
    // Predicated region
    $region38: #{tpu_custom_call.1} parent=1 // pred_check
      _
    $region39: #{tpu_custom_call.1} parent=1 // pred_check_branch
      %1880 = sbr.rel (0) target = $region41
    $region40: #{tpu_custom_call.1} parent=1 // pred_region
      %s1882 = ssub.s32 128, 128
      %1883 = vsyncadd [#allocation4], %s1882
      %s1885 = sshll.u32 [#allocation5], 4
      %s1886 = int_to_ptr.vmem [resolvable:$true] %s1885
      %1888 = dma.vmem_to_hbm [thread:$0]  %s1886, 128, %s8, [#allocation4]
    $region41: #{tpu_custom_call.1} parent=1 // pred_fallthru
      _
    // Predicated region
    $region42: #{tpu_custom_call.1} parent=1 // pred_check
      _
    $region43: #{tpu_custom_call.1} parent=1 // pred_check_branch
      %1890 = sbr.rel (0) target = $region45
    $region44: #{tpu_custom_call.1} parent=1 // pred_region
      %1891 = dma.done [#allocation4], 128
    $region45: #{tpu_custom_call.1} parent=1 // pred_fallthru
      _
    %1892 = vsyncpa [#allocation3], 1
    %1893 = vsyncpa [#allocation4], 1

</llo_original>
